<compile_context>
chip_gen: v7x
topology: tpu7x:2x2x1
jax: 0.10.0
libtpu: 0.0.40
codegen_flags: <defaults>
</compile_context>

<pallas_src>
import functools

import jax
import jax.numpy as jnp
from jax.experimental import pallas as pl
from jax.experimental.pallas import tpu as pltpu


def _layernorm(x, w, b, eps=1e-5):
    mu = jnp.mean(x, axis=-1, keepdims=True)
    xc = x - mu
    var = jnp.mean(xc * xc, axis=-1, keepdims=True)
    return xc * jax.lax.rsqrt(var + eps) * w + b


def _transformer_block_kernel(
    x_ref,                       # (1, T, D)   input rows for this batch element
    ln1w_ref, ln1b_ref,          # (1, D) f32
    wq_ref, wk_ref, wv_ref,      # (num_heads, D, head_size) bf16; q pre-scaled by 1/sqrt(head_size)
    wproj_ref,                   # (num_heads, head_size, D) bf16
    bproj_ref,                   # (1, D) f32
    ln2w_ref, ln2b_ref,          # (1, D) f32
    w1_ref, b1_ref,              # (D, hidden) bf16, (1, hidden) f32
    w2_ref, b2_ref,              # (hidden, D) bf16, (1, D) f32
    o_ref,                       # (1, TQ, D)
    k_scr, v_scr,                # (num_heads, T, head_size) bf16 VMEM scratch (persists over qi)
    *, num_heads, head_size, tq,
):
    f32, bf16 = jnp.float32, jnp.bfloat16
    T = x_ref.shape[1]
    D = num_heads * head_size
    qi = pl.program_id(1)
    unroll_heads = num_heads <= 8

    # ---- K/V projections for the whole sequence: once per batch element (qi == 0) ----
    @pl.when(qi == 0)
    def _():
        h_full = _layernorm(x_ref[0].astype(f32), ln1w_ref[...], ln1b_ref[...]).astype(bf16)

        def kv_body(hd, carry):
            k_scr[hd] = jnp.dot(h_full, wk_ref[hd], preferred_element_type=f32).astype(bf16)
            v_scr[hd] = jnp.dot(h_full, wv_ref[hd], preferred_element_type=f32).astype(bf16)
            return carry

        jax.lax.fori_loop(0, num_heads, kv_body, 0, unroll=unroll_heads)

    # ---- query-row tile of this grid step ----
    if tq == T:                                   # static branch: single-tile (toy / small T) path
        x_q = x_ref[0].astype(f32)                                       # (TQ, D)
    else:
        row0 = pl.multiple_of(qi * tq, 8)
        x_q = x_ref[0, pl.ds(row0, tq), :].astype(f32)                   # (TQ, D)
    h_q = _layernorm(x_q, ln1w_ref[...], ln1b_ref[...]).astype(bf16)

    # ---- attention: per-head loop, output projection folded into the f32 accumulator ----
    def head_body(hd, acc):
        q_h = jnp.dot(h_q, wq_ref[hd], preferred_element_type=f32).astype(bf16)   # (TQ, Hs)
        # q @ k^T: contract last dims of both -> transposed-rhs matmul, no XLU transpose of k
        s = jax.lax.dot_general(q_h, k_scr[hd], (((1,), (1,)), ((), ())),
                                preferred_element_type=f32)                        # (TQ, T)
        s = s - jnp.max(s, axis=-1, keepdims=True)
        p = jnp.exp(s)
        # approx reciprocal runs on the EUP slot; ~1e-3 rel err (swap to exact divide for training)
        p = p * pl.reciprocal(jnp.sum(p, axis=-1, keepdims=True), approx=True)
        head_out = jnp.dot(p.astype(bf16), v_scr[hd], preferred_element_type=f32)  # (TQ, Hs)
        return acc + jnp.dot(head_out.astype(bf16), wproj_ref[hd],
                             preferred_element_type=f32)                           # (TQ, D)

    sa = jax.lax.fori_loop(0, num_heads, head_body,
                           jnp.zeros((tq, D), dtype=f32), unroll=unroll_heads)
    x1 = x_q + sa + bproj_ref[...]                                                 # residual, f32

    # ---- LayerNorm 2 + MLP + residual (only the TQ rows of this step) ----
    h2 = _layernorm(x1, ln2w_ref[...], ln2b_ref[...]).astype(bf16)
    f1 = jnp.maximum(jnp.dot(h2, w1_ref[...], preferred_element_type=f32) + b1_ref[...], 0.0)
    f2 = jnp.dot(f1.astype(bf16), w2_ref[...], preferred_element_type=f32) + b2_ref[...]
    o_ref[0] = (x1 + f2).astype(o_ref.dtype)


def _pick_row_tile(T):
    """Largest query-row tile (multiple of 8) dividing T, capped at 256."""
    if T <= 256:
        return T
    for tq in (256, 128, 64, 32, 16, 8):
        if T % tq == 0:
            return tq
    return T


def _vmem_limit_bytes(operands, T, tq, D, hidden, num_heads, head_size):
    x = operands[0]
    weight_bytes = sum(int(a.size) * a.dtype.itemsize for a in operands[1:])
    x_block = T * D * x.dtype.itemsize
    o_block = tq * D * x.dtype.itemsize
    kv_scratch = 2 * num_heads * T * head_size * 2                 # bf16 K/V scratch
    live = 4 * (tq * T + tq * hidden + 6 * tq * D)                 # rough f32 intermediates
    want = 2 * (x_block + o_block) + 2 * weight_bytes + kv_scratch + live + (8 << 20)
    cap = 64 << 20                                                  # v7x-safe fallback
    try:
        cap = int(getattr(pltpu.get_tpu_info(), "vmem_capacity_bytes", cap))
    except Exception:
        pass
    hi = int(cap * 0.85)
    return max(min(want, hi), min(32 << 20, hi))


def transformer_block(x, params, *, num_heads, head_size):
    """x: (B, T, n_embd). params: PyTorch-layout weights (see __main__)."""
    B, T, D = x.shape
    assert num_heads * head_size == D
    hidden = params["w1"].shape[0]
    f32, bf16 = jnp.float32, jnp.bfloat16

    # --- wrapper-side weight plumbing: per-head layout, transposes, scale fold, bf16 cast ---
    scale = 1.0 / jnp.sqrt(jnp.float32(head_size))
    to_heads = lambda w: jnp.transpose(w.reshape(num_heads, head_size, D), (0, 2, 1))
    wq_h = (to_heads(params["wq"]) * scale).astype(bf16)           # (H, D, Hs), 1/sqrt(Hs) folded
    wk_h = to_heads(params["wk"]).astype(bf16)
    wv_h = to_heads(params["wv"]).astype(bf16)
    wproj_h = params["wproj"].T.reshape(num_heads, head_size, D).astype(bf16)
    w1_t = params["w1"].T.astype(bf16)                             # (D, hidden)
    w2_t = params["w2"].T.astype(bf16)                             # (hidden, D)
    row = lambda v: v.reshape(1, -1).astype(f32)

    operands = (
        x,
        row(params["ln1_w"]), row(params["ln1_b"]),
        wq_h, wk_h, wv_h, wproj_h, row(params["bproj"]),
        row(params["ln2_w"]), row(params["ln2_b"]),
        w1_t, row(params["b1"]), w2_t, row(params["b2"]),
    )

    tq = _pick_row_tile(T)
    nq = T // tq

    def full_spec(a):
        nd = a.ndim
        return pl.BlockSpec(a.shape, lambda b, q, _nd=nd: (0,) * _nd)

    in_specs = [pl.BlockSpec((1, T, D), lambda b, q: (b, 0, 0))]     # full sequence (for K/V)
    in_specs += [full_spec(a) for a in operands[1:]]
    out_spec = pl.BlockSpec((1, tq, D), lambda b, q: (b, q, 0))

    flops = (2 * B * T * D * (3 * D)            # q/k/v projections
             + 4 * B * T * T * D                # scores + p@v over all heads
             + 2 * B * T * D * D                # output projection (folded per head)
             + 4 * B * T * D * hidden)          # MLP
    cost = pl.CostEstimate(
        flops=flops,
        transcendentals=B * num_heads * T * T + 4 * B * T,
        bytes_accessed=int(2 * B * T * D * x.dtype.itemsize
                           + sum(int(a.size) * a.dtype.itemsize for a in operands[1:])),
    )

    kernel = functools.partial(_transformer_block_kernel,
                               num_heads=num_heads, head_size=head_size, tq=tq)

    return pl.pallas_call(
        kernel,
        out_shape=jax.ShapeDtypeStruct((B, T, D), x.dtype),
        grid_spec=pltpu.PrefetchScalarGridSpec(
            num_scalar_prefetch=0,
            grid=(B, nq),
            in_specs=in_specs,
            out_specs=out_spec,
            scratch_shapes=[
                pltpu.VMEM((num_heads, T, head_size), jnp.bfloat16),   # K scratch
                pltpu.VMEM((num_heads, T, head_size), jnp.bfloat16),   # V scratch
            ],
        ),
        compiler_params=pltpu.CompilerParams(
            dimension_semantics=("parallel", "arbitrary"),
            vmem_limit_bytes=_vmem_limit_bytes(operands, T, tq, D, hidden,
                                               num_heads, head_size),
        ),
        cost_estimate=cost,
    )(*operands)


def _reference(x, params, *, num_heads, head_size):
    def ln(v, w, b, eps=1e-5):
        mu = v.mean(-1, keepdims=True)
        var = ((v - mu) ** 2).mean(-1, keepdims=True)
        return (v - mu) / jnp.sqrt(var + eps) * w + b

    scale = 1.0 / jnp.sqrt(jnp.float32(head_size))
    h = ln(x, params["ln1_w"], params["ln1_b"])
    outs = []
    for i in range(num_heads):
        q = h @ params["wq"][i].T
        k = h @ params["wk"][i].T
        v = h @ params["wv"][i].T
        s = jnp.einsum("btd,bsd->bts", q, k) * scale
        p = jax.nn.softmax(s, axis=-1)
        outs.append(jnp.einsum("bts,bsd->btd", p, v))
    sa = jnp.concatenate(outs, axis=-1) @ params["wproj"].T + params["bproj"]
    x1 = x + sa
    h2 = ln(x1, params["ln2_w"], params["ln2_b"])
    f = jax.nn.relu(h2 @ params["w1"].T + params["b1"]) @ params["w2"].T + params["b2"]
    return x1 + f


if __name__ == "__main__":
    B, T = 2, 8
    n_embd, n_head, hidden_size = 32, 2, 64
    head_size = n_embd // n_head

    key = jax.random.PRNGKey(0)
    keys = jax.random.split(key, 16)

    x = jax.random.normal(keys[0], (B, T, n_embd), dtype=jnp.float32)

    def uni(k, shape, fan_in):
        bound = 1.0 / jnp.sqrt(jnp.float32(fan_in))
        return jax.random.uniform(k, shape, minval=-bound, maxval=bound, dtype=jnp.float32)

    params = dict(
        wq=uni(keys[1], (n_head, head_size, n_embd), n_embd),
        wk=uni(keys[2], (n_head, head_size, n_embd), n_embd),
        wv=uni(keys[3], (n_head, head_size, n_embd), n_embd),
        wproj=uni(keys[4], (n_embd, n_embd), n_embd),
        bproj=uni(keys[5], (n_embd,), n_embd),
        ln1_w=1.0 + 0.1 * jax.random.normal(keys[6], (n_embd,), dtype=jnp.float32),
        ln1_b=0.1 * jax.random.normal(keys[7], (n_embd,), dtype=jnp.float32),
        ln2_w=1.0 + 0.1 * jax.random.normal(keys[8], (n_embd,), dtype=jnp.float32),
        ln2_b=0.1 * jax.random.normal(keys[9], (n_embd,), dtype=jnp.float32),
        w1=uni(keys[10], (hidden_size, n_embd), n_embd),
        b1=uni(keys[11], (hidden_size,), n_embd),
        w2=uni(keys[12], (n_embd, hidden_size), hidden_size),
        b2=uni(keys[13], (n_embd,), hidden_size),
    )

    out = transformer_block(x, params, num_heads=n_head, head_size=head_size)
    out = jax.block_until_ready(out)

    ref = _reference(x, params, num_heads=n_head, head_size=head_size)
    assert out.shape == (B, T, n_embd)
    err = float(jnp.max(jnp.abs(out - ref)))
    # bf16 MXU operands + approx reciprocal -> expect ~1e-2-level absolute error vs f32 reference
    assert err < 3e-2, f"mismatch vs reference (max abs diff {err})"

    print("KERNEL_OK")
</pallas_src>

<mosaic_0001>
module attributes {stable_mosaic.version = 11 : i64} {
  func.func @_transformer_block_kernel(%arg0: i32, %arg1: i32, %arg2: memref<1x8x32xf32, #tpu.memory_space<vmem>>, %arg3: memref<1x32xf32, #tpu.memory_space<vmem>>, %arg4: memref<1x32xf32, #tpu.memory_space<vmem>>, %arg5: memref<2x32x16xbf16, #tpu.memory_space<vmem>>, %arg6: memref<2x32x16xbf16, #tpu.memory_space<vmem>>, %arg7: memref<2x32x16xbf16, #tpu.memory_space<vmem>>, %arg8: memref<2x16x32xbf16, #tpu.memory_space<vmem>>, %arg9: memref<1x32xf32, #tpu.memory_space<vmem>>, %arg10: memref<1x32xf32, #tpu.memory_space<vmem>>, %arg11: memref<1x32xf32, #tpu.memory_space<vmem>>, %arg12: memref<32x64xbf16, #tpu.memory_space<vmem>>, %arg13: memref<1x64xf32, #tpu.memory_space<vmem>>, %arg14: memref<64x32xbf16, #tpu.memory_space<vmem>>, %arg15: memref<1x32xf32, #tpu.memory_space<vmem>>, %arg16: memref<1x8x32xf32, #tpu.memory_space<vmem>>, %arg17: memref<2x8x16xbf16, #tpu.memory_space<vmem>>, %arg18: memref<2x8x16xbf16, #tpu.memory_space<vmem>>) attributes {dimension_semantics = [#tpu.dimension_semantics<parallel>, #tpu.dimension_semantics<arbitrary>], iteration_bounds = array<i64: 2, 1>, scalar_prefetch = 0 : i64, scratch_operands = 2 : i64, tpu.core_type = #tpu.core_type<tc>, window_params = [{transform_indices = @transform_0, window_bounds = array<i64: 1, 8, 32>}, {pipeline_mode = #tpu.pipeline_mode<synchronous>, transform_indices = @transform_1, window_bounds = array<i64: 1, 32>}, {pipeline_mode = #tpu.pipeline_mode<synchronous>, transform_indices = @transform_2, window_bounds = array<i64: 1, 32>}, {pipeline_mode = #tpu.pipeline_mode<synchronous>, transform_indices = @transform_3, window_bounds = array<i64: 2, 32, 16>}, {pipeline_mode = #tpu.pipeline_mode<synchronous>, transform_indices = @transform_4, window_bounds = array<i64: 2, 32, 16>}, {pipeline_mode = #tpu.pipeline_mode<synchronous>, transform_indices = @transform_5, window_bounds = array<i64: 2, 32, 16>}, {pipeline_mode = #tpu.pipeline_mode<synchronous>, transform_indices = @transform_6, window_bounds = array<i64: 2, 16, 32>}, {pipeline_mode = #tpu.pipeline_mode<synchronous>, transform_indices = @transform_7, window_bounds = array<i64: 1, 32>}, {pipeline_mode = #tpu.pipeline_mode<synchronous>, transform_indices = @transform_8, window_bounds = array<i64: 1, 32>}, {pipeline_mode = #tpu.pipeline_mode<synchronous>, transform_indices = @transform_9, window_bounds = array<i64: 1, 32>}, {pipeline_mode = #tpu.pipeline_mode<synchronous>, transform_indices = @transform_10, window_bounds = array<i64: 32, 64>}, {pipeline_mode = #tpu.pipeline_mode<synchronous>, transform_indices = @transform_11, window_bounds = array<i64: 1, 64>}, {pipeline_mode = #tpu.pipeline_mode<synchronous>, transform_indices = @transform_12, window_bounds = array<i64: 64, 32>}, {pipeline_mode = #tpu.pipeline_mode<synchronous>, transform_indices = @transform_13, window_bounds = array<i64: 1, 32>}, {transform_indices = @transform_14, window_bounds = array<i64: 1, 8, 32>}]} {
    %c0_i32 = arith.constant 0 : i32
    %0 = arith.cmpi eq, %arg1, %c0_i32 : i32
    %1 = arith.extui %0 : i1 to i32
    %c0_i32_0 = arith.constant 0 : i32
    %2 = arith.cmpi ne, %1, %c0_i32_0 : i32
    scf.if %2 {
      %c0_66 = arith.constant 0 : index
      %c0_67 = arith.constant 0 : index
      %c0_68 = arith.constant 0 : index
      %133 = vector.load %arg2[%c0_66, %c0_67, %c0_68] : memref<1x8x32xf32, #tpu.memory_space<vmem>>, vector<1x8x32xf32>
      %134 = vector.shape_cast %133 : vector<1x8x32xf32> to vector<8x32xf32>
      %c0_69 = arith.constant 0 : index
      %c0_70 = arith.constant 0 : index
      %135 = vector.load %arg3[%c0_69, %c0_70] : memref<1x32xf32, #tpu.memory_space<vmem>>, vector<1x32xf32>
      %c0_71 = arith.constant 0 : index
      %c0_72 = arith.constant 0 : index
      %136 = vector.load %arg4[%c0_71, %c0_72] : memref<1x32xf32, #tpu.memory_space<vmem>>, vector<1x32xf32>
      %cst_73 = arith.constant dense<0.000000e+00> : vector<8xf32>
      %137 = vector.multi_reduction <add>, %134, %cst_73 [1] : vector<8x32xf32> to vector<8xf32>
      %138 = vector.shape_cast %137 : vector<8xf32> to vector<8x1xf32>
      %cst_74 = arith.constant 3.200000e+01 : f32
      %139 = vector.broadcast %cst_74 : f32 to vector<8x1xf32>
      %140 = arith.divf %138, %139 : vector<8x1xf32>
      %141 = vector.broadcast %140 : vector<8x1xf32> to vector<8x32xf32>
      %142 = arith.subf %134, %141 : vector<8x32xf32>
      %143 = arith.mulf %142, %142 : vector<8x32xf32>
      %cst_75 = arith.constant dense<0.000000e+00> : vector<8xf32>
      %144 = vector.multi_reduction <add>, %143, %cst_75 [1] : vector<8x32xf32> to vector<8xf32>
      %145 = vector.shape_cast %144 : vector<8xf32> to vector<8x1xf32>
      %cst_76 = arith.constant 3.200000e+01 : f32
      %146 = vector.broadcast %cst_76 : f32 to vector<8x1xf32>
      %147 = arith.divf %145, %146 : vector<8x1xf32>
      %cst_77 = arith.constant 9.99999974E-6 : f32
      %148 = vector.broadcast %cst_77 : f32 to vector<8x1xf32>
      %149 = arith.addf %147, %148 : vector<8x1xf32>
      %150 = math.rsqrt %149 : vector<8x1xf32>
      %151 = vector.broadcast %150 : vector<8x1xf32> to vector<8x32xf32>
      %152 = arith.mulf %142, %151 : vector<8x32xf32>
      %153 = vector.broadcast %135 : vector<1x32xf32> to vector<8x32xf32>
      %154 = arith.mulf %152, %153 : vector<8x32xf32>
      %155 = vector.broadcast %136 : vector<1x32xf32> to vector<8x32xf32>
      %156 = arith.addf %154, %155 : vector<8x32xf32>
      %157 = arith.truncf %156 : vector<8x32xf32> to vector<8x32xbf16>
      %c0_i32_78 = arith.constant 0 : i32
      %158 = arith.index_cast %c0_i32_78 : i32 to index
      %c0_79 = arith.constant 0 : index
      %c0_80 = arith.constant 0 : index
      %159 = vector.load %arg6[%158, %c0_79, %c0_80] : memref<2x32x16xbf16, #tpu.memory_space<vmem>>, vector<1x32x16xbf16>
      %160 = vector.shape_cast %159 : vector<1x32x16xbf16> to vector<32x16xbf16>
      %cst_81 = arith.constant dense<0.000000e+00> : vector<8x16xf32>
      %161 = tpu.matmul %157, %160, %cst_81 {dimension_numbers = #tpu.dot_dimension_numbers<[1], [0], [0], [1], [0, 0, 1, 1], [], []>} : vector<8x32xbf16>, vector<32x16xbf16>, vector<8x16xf32> -> vector<8x16xf32>
      %162 = arith.truncf %161 : vector<8x16xf32> to vector<8x16xbf16>
      %163 = arith.index_cast %c0_i32_78 : i32 to index
      %c0_82 = arith.constant 0 : index
      %c0_83 = arith.constant 0 : index
      %164 = vector.load %arg17[%163, %c0_82, %c0_83] : memref<2x8x16xbf16, #tpu.memory_space<vmem>>, vector<1x8x16xbf16>
      %165 = vector.shape_cast %164 : vector<1x8x16xbf16> to vector<8x16xbf16>
      %166 = vector.shape_cast %162 : vector<8x16xbf16> to vector<1x8x16xbf16>
      tpu.vector_store %arg17[%163, %c0_82, %c0_83], %166 {strides = array<i32>} : memref<2x8x16xbf16, #tpu.memory_space<vmem>>, vector<1x8x16xbf16>,
      %167 = arith.index_cast %c0_i32_78 : i32 to index
      %c0_84 = arith.constant 0 : index
      %c0_85 = arith.constant 0 : index
      %168 = vector.load %arg7[%167, %c0_84, %c0_85] : memref<2x32x16xbf16, #tpu.memory_space<vmem>>, vector<1x32x16xbf16>
      %169 = vector.shape_cast %168 : vector<1x32x16xbf16> to vector<32x16xbf16>
      %cst_86 = arith.constant dense<0.000000e+00> : vector<8x16xf32>
      %170 = tpu.matmul %157, %169, %cst_86 {dimension_numbers = #tpu.dot_dimension_numbers<[1], [0], [0], [1], [0, 0, 1, 1], [], []>} : vector<8x32xbf16>, vector<32x16xbf16>, vector<8x16xf32> -> vector<8x16xf32>
      %171 = arith.truncf %170 : vector<8x16xf32> to vector<8x16xbf16>
      %172 = arith.index_cast %c0_i32_78 : i32 to index
      %c0_87 = arith.constant 0 : index
      %c0_88 = arith.constant 0 : index
      %173 = vector.load %arg18[%172, %c0_87, %c0_88] : memref<2x8x16xbf16, #tpu.memory_space<vmem>>, vector<1x8x16xbf16>
      %174 = vector.shape_cast %173 : vector<1x8x16xbf16> to vector<8x16xbf16>
      %175 = vector.shape_cast %171 : vector<8x16xbf16> to vector<1x8x16xbf16>
      tpu.vector_store %arg18[%172, %c0_87, %c0_88], %175 {strides = array<i32>} : memref<2x8x16xbf16, #tpu.memory_space<vmem>>, vector<1x8x16xbf16>,
      %c1_i32_89 = arith.constant 1 : i32
      %176 = arith.index_cast %c1_i32_89 : i32 to index
      %c0_90 = arith.constant 0 : index
      %c0_91 = arith.constant 0 : index
      %177 = vector.load %arg6[%176, %c0_90, %c0_91] : memref<2x32x16xbf16, #tpu.memory_space<vmem>>, vector<1x32x16xbf16>
      %178 = vector.shape_cast %177 : vector<1x32x16xbf16> to vector<32x16xbf16>
      %cst_92 = arith.constant dense<0.000000e+00> : vector<8x16xf32>
      %179 = tpu.matmul %157, %178, %cst_92 {dimension_numbers = #tpu.dot_dimension_numbers<[1], [0], [0], [1], [0, 0, 1, 1], [], []>} : vector<8x32xbf16>, vector<32x16xbf16>, vector<8x16xf32> -> vector<8x16xf32>
      %180 = arith.truncf %179 : vector<8x16xf32> to vector<8x16xbf16>
      %181 = arith.index_cast %c1_i32_89 : i32 to index
      %c0_93 = arith.constant 0 : index
      %c0_94 = arith.constant 0 : index
      %182 = vector.load %arg17[%181, %c0_93, %c0_94] : memref<2x8x16xbf16, #tpu.memory_space<vmem>>, vector<1x8x16xbf16>
      %183 = vector.shape_cast %182 : vector<1x8x16xbf16> to vector<8x16xbf16>
      %184 = vector.shape_cast %180 : vector<8x16xbf16> to vector<1x8x16xbf16>
      tpu.vector_store %arg17[%181, %c0_93, %c0_94], %184 {strides = array<i32>} : memref<2x8x16xbf16, #tpu.memory_space<vmem>>, vector<1x8x16xbf16>,
      %185 = arith.index_cast %c1_i32_89 : i32 to index
      %c0_95 = arith.constant 0 : index
      %c0_96 = arith.constant 0 : index
      %186 = vector.load %arg7[%185, %c0_95, %c0_96] : memref<2x32x16xbf16, #tpu.memory_space<vmem>>, vector<1x32x16xbf16>
      %187 = vector.shape_cast %186 : vector<1x32x16xbf16> to vector<32x16xbf16>
      %cst_97 = arith.constant dense<0.000000e+00> : vector<8x16xf32>
      %188 = tpu.matmul %157, %187, %cst_97 {dimension_numbers = #tpu.dot_dimension_numbers<[1], [0], [0], [1], [0, 0, 1, 1], [], []>} : vector<8x32xbf16>, vector<32x16xbf16>, vector<8x16xf32> -> vector<8x16xf32>
      %189 = arith.truncf %188 : vector<8x16xf32> to vector<8x16xbf16>
      %190 = arith.index_cast %c1_i32_89 : i32 to index
      %c0_98 = arith.constant 0 : index
      %c0_99 = arith.constant 0 : index
      %191 = vector.load %arg18[%190, %c0_98, %c0_99] : memref<2x8x16xbf16, #tpu.memory_space<vmem>>, vector<1x8x16xbf16>
      %192 = vector.shape_cast %191 : vector<1x8x16xbf16> to vector<8x16xbf16>
      %193 = vector.shape_cast %189 : vector<8x16xbf16> to vector<1x8x16xbf16>
      tpu.vector_store %arg18[%190, %c0_98, %c0_99], %193 {strides = array<i32>} : memref<2x8x16xbf16, #tpu.memory_space<vmem>>, vector<1x8x16xbf16>,
      %c2_i32_100 = arith.constant 2 : i32
    } else {
    }
    %c0 = arith.constant 0 : index
    %c0_1 = arith.constant 0 : index
    %c0_2 = arith.constant 0 : index
    %3 = vector.load %arg2[%c0, %c0_1, %c0_2] : memref<1x8x32xf32, #tpu.memory_space<vmem>>, vector<1x8x32xf32>
    %4 = vector.shape_cast %3 : vector<1x8x32xf32> to vector<8x32xf32>
    %c0_3 = arith.constant 0 : index
    %c0_4 = arith.constant 0 : index
    %5 = vector.load %arg3[%c0_3, %c0_4] : memref<1x32xf32, #tpu.memory_space<vmem>>, vector<1x32xf32>
    %c0_5 = arith.constant 0 : index
    %c0_6 = arith.constant 0 : index
    %6 = vector.load %arg4[%c0_5, %c0_6] : memref<1x32xf32, #tpu.memory_space<vmem>>, vector<1x32xf32>
    %cst = arith.constant dense<0.000000e+00> : vector<8xf32>
    %7 = vector.multi_reduction <add>, %4, %cst [1] : vector<8x32xf32> to vector<8xf32>
    %8 = vector.shape_cast %7 : vector<8xf32> to vector<8x1xf32>
    %cst_7 = arith.constant 3.200000e+01 : f32
    %9 = vector.broadcast %cst_7 : f32 to vector<8x1xf32>
    %10 = arith.divf %8, %9 : vector<8x1xf32>
    %11 = vector.broadcast %10 : vector<8x1xf32> to vector<8x32xf32>
    %12 = arith.subf %4, %11 : vector<8x32xf32>
    %13 = arith.mulf %12, %12 : vector<8x32xf32>
    %cst_8 = arith.constant dense<0.000000e+00> : vector<8xf32>
    %14 = vector.multi_reduction <add>, %13, %cst_8 [1] : vector<8x32xf32> to vector<8xf32>
    %15 = vector.shape_cast %14 : vector<8xf32> to vector<8x1xf32>
    %cst_9 = arith.constant 3.200000e+01 : f32
    %16 = vector.broadcast %cst_9 : f32 to vector<8x1xf32>
    %17 = arith.divf %15, %16 : vector<8x1xf32>
    %cst_10 = arith.constant 9.99999974E-6 : f32
    %18 = vector.broadcast %cst_10 : f32 to vector<8x1xf32>
    %19 = arith.addf %17, %18 : vector<8x1xf32>
    %20 = math.rsqrt %19 : vector<8x1xf32>
    %21 = vector.broadcast %20 : vector<8x1xf32> to vector<8x32xf32>
    %22 = arith.mulf %12, %21 : vector<8x32xf32>
    %23 = vector.broadcast %5 : vector<1x32xf32> to vector<8x32xf32>
    %24 = arith.mulf %22, %23 : vector<8x32xf32>
    %25 = vector.broadcast %6 : vector<1x32xf32> to vector<8x32xf32>
    %26 = arith.addf %24, %25 : vector<8x32xf32>
    %27 = arith.truncf %26 : vector<8x32xf32> to vector<8x32xbf16>
    %cst_11 = arith.constant 0.000000e+00 : f32
    %28 = vector.broadcast %cst_11 : f32 to vector<8x32xf32>
    %c0_i32_12 = arith.constant 0 : i32
    %29 = arith.index_cast %c0_i32_12 : i32 to index
    %c0_13 = arith.constant 0 : index
    %c0_14 = arith.constant 0 : index
    %30 = vector.load %arg5[%29, %c0_13, %c0_14] : memref<2x32x16xbf16, #tpu.memory_space<vmem>>, vector<1x32x16xbf16>
    %31 = vector.shape_cast %30 : vector<1x32x16xbf16> to vector<32x16xbf16>
    %cst_15 = arith.constant dense<0.000000e+00> : vector<8x16xf32>
    %32 = tpu.matmul %27, %31, %cst_15 {dimension_numbers = #tpu.dot_dimension_numbers<[1], [0], [0], [1], [0, 0, 1, 1], [], []>} : vector<8x32xbf16>, vector<32x16xbf16>, vector<8x16xf32> -> vector<8x16xf32>
    %33 = arith.truncf %32 : vector<8x16xf32> to vector<8x16xbf16>
    %34 = arith.index_cast %c0_i32_12 : i32 to index
    %c0_16 = arith.constant 0 : index
    %c0_17 = arith.constant 0 : index
    %35 = vector.load %arg17[%34, %c0_16, %c0_17] : memref<2x8x16xbf16, #tpu.memory_space<vmem>>, vector<1x8x16xbf16>
    %36 = vector.shape_cast %35 : vector<1x8x16xbf16> to vector<8x16xbf16>
    %cst_18 = arith.constant dense<0.000000e+00> : vector<8x8xf32>
    %37 = tpu.matmul %33, %36, %cst_18 {dimension_numbers = #tpu.dot_dimension_numbers<[1], [1], [0], [0], [0, 0, 1, 0], [], []>} : vector<8x16xbf16>, vector<8x16xbf16>, vector<8x8xf32> -> vector<8x8xf32>
    %cst_19 = arith.constant dense<0xFF800000> : vector<8xf32>
    %38 = vector.multi_reduction <maximumf>, %37, %cst_19 [1] : vector<8x8xf32> to vector<8xf32>
    %39 = vector.shape_cast %38 : vector<8xf32> to vector<8x1xf32>
    %40 = vector.broadcast %39 : vector<8x1xf32> to vector<8x8xf32>
    %41 = arith.subf %37, %40 : vector<8x8xf32>
    %42 = math.exp %41 : vector<8x8xf32>
    %cst_20 = arith.constant dense<0.000000e+00> : vector<8xf32>
    %43 = vector.multi_reduction <add>, %42, %cst_20 [1] : vector<8x8xf32> to vector<8xf32>
    %44 = vector.shape_cast %43 : vector<8xf32> to vector<8x1xf32>
    %45 = tpu.reciprocal %44 {approx = true} : vector<8x1xf32> -> vector<8x1xf32>
    %46 = vector.broadcast %45 : vector<8x1xf32> to vector<8x8xf32>
    %47 = arith.mulf %42, %46 : vector<8x8xf32>
    %48 = arith.truncf %47 : vector<8x8xf32> to vector<8x8xbf16>
    %49 = arith.index_cast %c0_i32_12 : i32 to index
    %c0_21 = arith.constant 0 : index
    %c0_22 = arith.constant 0 : index
    %50 = vector.load %arg18[%49, %c0_21, %c0_22] : memref<2x8x16xbf16, #tpu.memory_space<vmem>>, vector<1x8x16xbf16>
    %51 = vector.shape_cast %50 : vector<1x8x16xbf16> to vector<8x16xbf16>
    %cst_23 = arith.constant dense<0.000000e+00> : vector<8x16xf32>
    %52 = tpu.matmul %48, %51, %cst_23 {dimension_numbers = #tpu.dot_dimension_numbers<[1], [0], [0], [1], [0, 0, 1, 1], [], []>} : vector<8x8xbf16>, vector<8x16xbf16>, vector<8x16xf32> -> vector<8x16xf32>
    %53 = arith.truncf %52 : vector<8x16xf32> to vector<8x16xbf16>
    %54 = arith.index_cast %c0_i32_12 : i32 to index
    %c0_24 = arith.constant 0 : index
    %c0_25 = arith.constant 0 : index
    %55 = vector.load %arg8[%54, %c0_24, %c0_25] : memref<2x16x32xbf16, #tpu.memory_space<vmem>>, vector<1x16x32xbf16>
    %56 = vector.shape_cast %55 : vector<1x16x32xbf16> to vector<16x32xbf16>
    %cst_26 = arith.constant dense<0.000000e+00> : vector<8x32xf32>
    %57 = tpu.matmul %53, %56, %cst_26 {dimension_numbers = #tpu.dot_dimension_numbers<[1], [0], [0], [1], [0, 0, 1, 1], [], []>} : vector<8x16xbf16>, vector<16x32xbf16>, vector<8x32xf32> -> vector<8x32xf32>
    %58 = arith.addf %28, %57 : vector<8x32xf32>
    %c1_i32 = arith.constant 1 : i32
    %59 = arith.index_cast %c1_i32 : i32 to index
    %c0_27 = arith.constant 0 : index
    %c0_28 = arith.constant 0 : index
    %60 = vector.load %arg5[%59, %c0_27, %c0_28] : memref<2x32x16xbf16, #tpu.memory_space<vmem>>, vector<1x32x16xbf16>
    %61 = vector.shape_cast %60 : vector<1x32x16xbf16> to vector<32x16xbf16>
    %cst_29 = arith.constant dense<0.000000e+00> : vector<8x16xf32>
    %62 = tpu.matmul %27, %61, %cst_29 {dimension_numbers = #tpu.dot_dimension_numbers<[1], [0], [0], [1], [0, 0, 1, 1], [], []>} : vector<8x32xbf16>, vector<32x16xbf16>, vector<8x16xf32> -> vector<8x16xf32>
    %63 = arith.truncf %62 : vector<8x16xf32> to vector<8x16xbf16>
    %64 = arith.index_cast %c1_i32 : i32 to index
    %c0_30 = arith.constant 0 : index
    %c0_31 = arith.constant 0 : index
    %65 = vector.load %arg17[%64, %c0_30, %c0_31] : memref<2x8x16xbf16, #tpu.memory_space<vmem>>, vector<1x8x16xbf16>
    %66 = vector.shape_cast %65 : vector<1x8x16xbf16> to vector<8x16xbf16>
    %cst_32 = arith.constant dense<0.000000e+00> : vector<8x8xf32>
    %67 = tpu.matmul %63, %66, %cst_32 {dimension_numbers = #tpu.dot_dimension_numbers<[1], [1], [0], [0], [0, 0, 1, 0], [], []>} : vector<8x16xbf16>, vector<8x16xbf16>, vector<8x8xf32> -> vector<8x8xf32>
    %cst_33 = arith.constant dense<0xFF800000> : vector<8xf32>
    %68 = vector.multi_reduction <maximumf>, %67, %cst_33 [1] : vector<8x8xf32> to vector<8xf32>
    %69 = vector.shape_cast %68 : vector<8xf32> to vector<8x1xf32>
    %70 = vector.broadcast %69 : vector<8x1xf32> to vector<8x8xf32>
    %71 = arith.subf %67, %70 : vector<8x8xf32>
    %72 = math.exp %71 : vector<8x8xf32>
    %cst_34 = arith.constant dense<0.000000e+00> : vector<8xf32>
    %73 = vector.multi_reduction <add>, %72, %cst_34 [1] : vector<8x8xf32> to vector<8xf32>
    %74 = vector.shape_cast %73 : vector<8xf32> to vector<8x1xf32>
    %75 = tpu.reciprocal %74 {approx = true} : vector<8x1xf32> -> vector<8x1xf32>
    %76 = vector.broadcast %75 : vector<8x1xf32> to vector<8x8xf32>
    %77 = arith.mulf %72, %76 : vector<8x8xf32>
    %78 = arith.truncf %77 : vector<8x8xf32> to vector<8x8xbf16>
    %79 = arith.index_cast %c1_i32 : i32 to index
    %c0_35 = arith.constant 0 : index
    %c0_36 = arith.constant 0 : index
    %80 = vector.load %arg18[%79, %c0_35, %c0_36] : memref<2x8x16xbf16, #tpu.memory_space<vmem>>, vector<1x8x16xbf16>
    %81 = vector.shape_cast %80 : vector<1x8x16xbf16> to vector<8x16xbf16>
    %cst_37 = arith.constant dense<0.000000e+00> : vector<8x16xf32>
    %82 = tpu.matmul %78, %81, %cst_37 {dimension_numbers = #tpu.dot_dimension_numbers<[1], [0], [0], [1], [0, 0, 1, 1], [], []>} : vector<8x8xbf16>, vector<8x16xbf16>, vector<8x16xf32> -> vector<8x16xf32>
    %83 = arith.truncf %82 : vector<8x16xf32> to vector<8x16xbf16>
    %84 = arith.index_cast %c1_i32 : i32 to index
    %c0_38 = arith.constant 0 : index
    %c0_39 = arith.constant 0 : index
    %85 = vector.load %arg8[%84, %c0_38, %c0_39] : memref<2x16x32xbf16, #tpu.memory_space<vmem>>, vector<1x16x32xbf16>
    %86 = vector.shape_cast %85 : vector<1x16x32xbf16> to vector<16x32xbf16>
    %cst_40 = arith.constant dense<0.000000e+00> : vector<8x32xf32>
    %87 = tpu.matmul %83, %86, %cst_40 {dimension_numbers = #tpu.dot_dimension_numbers<[1], [0], [0], [1], [0, 0, 1, 1], [], []>} : vector<8x16xbf16>, vector<16x32xbf16>, vector<8x32xf32> -> vector<8x32xf32>
    %88 = arith.addf %58, %87 : vector<8x32xf32>
    %c2_i32 = arith.constant 2 : i32
    %89 = arith.addf %4, %88 : vector<8x32xf32>
    %c0_41 = arith.constant 0 : index
    %c0_42 = arith.constant 0 : index
    %90 = vector.load %arg9[%c0_41, %c0_42] : memref<1x32xf32, #tpu.memory_space<vmem>>, vector<1x32xf32>
    %91 = vector.broadcast %90 : vector<1x32xf32> to vector<8x32xf32>
    %92 = arith.addf %89, %91 : vector<8x32xf32>
    %c0_43 = arith.constant 0 : index
    %c0_44 = arith.constant 0 : index
    %93 = vector.load %arg10[%c0_43, %c0_44] : memref<1x32xf32, #tpu.memory_space<vmem>>, vector<1x32xf32>
    %c0_45 = arith.constant 0 : index
    %c0_46 = arith.constant 0 : index
    %94 = vector.load %arg11[%c0_45, %c0_46] : memref<1x32xf32, #tpu.memory_space<vmem>>, vector<1x32xf32>
    %cst_47 = arith.constant dense<0.000000e+00> : vector<8xf32>
    %95 = vector.multi_reduction <add>, %92, %cst_47 [1] : vector<8x32xf32> to vector<8xf32>
    %96 = vector.shape_cast %95 : vector<8xf32> to vector<8x1xf32>
    %cst_48 = arith.constant 3.200000e+01 : f32
    %97 = vector.broadcast %cst_48 : f32 to vector<8x1xf32>
    %98 = arith.divf %96, %97 : vector<8x1xf32>
    %99 = vector.broadcast %98 : vector<8x1xf32> to vector<8x32xf32>
    %100 = arith.subf %92, %99 : vector<8x32xf32>
    %101 = arith.mulf %100, %100 : vector<8x32xf32>
    %cst_49 = arith.constant dense<0.000000e+00> : vector<8xf32>
    %102 = vector.multi_reduction <add>, %101, %cst_49 [1] : vector<8x32xf32> to vector<8xf32>
    %103 = vector.shape_cast %102 : vector<8xf32> to vector<8x1xf32>
    %cst_50 = arith.constant 3.200000e+01 : f32
    %104 = vector.broadcast %cst_50 : f32 to vector<8x1xf32>
    %105 = arith.divf %103, %104 : vector<8x1xf32>
    %cst_51 = arith.constant 9.99999974E-6 : f32
    %106 = vector.broadcast %cst_51 : f32 to vector<8x1xf32>
    %107 = arith.addf %105, %106 : vector<8x1xf32>
    %108 = math.rsqrt %107 : vector<8x1xf32>
    %109 = vector.broadcast %108 : vector<8x1xf32> to vector<8x32xf32>
    %110 = arith.mulf %100, %109 : vector<8x32xf32>
    %111 = vector.broadcast %93 : vector<1x32xf32> to vector<8x32xf32>
    %112 = arith.mulf %110, %111 : vector<8x32xf32>
    %113 = vector.broadcast %94 : vector<1x32xf32> to vector<8x32xf32>
    %114 = arith.addf %112, %113 : vector<8x32xf32>
    %115 = arith.truncf %114 : vector<8x32xf32> to vector<8x32xbf16>
    %c0_52 = arith.constant 0 : index
    %c0_53 = arith.constant 0 : index
    %116 = vector.load %arg12[%c0_52, %c0_53] : memref<32x64xbf16, #tpu.memory_space<vmem>>, vector<32x64xbf16>
    %cst_54 = arith.constant dense<0.000000e+00> : vector<8x64xf32>
    %117 = tpu.matmul %115, %116, %cst_54 {dimension_numbers = #tpu.dot_dimension_numbers<[1], [0], [0], [1], [0, 0, 1, 1], [], []>} : vector<8x32xbf16>, vector<32x64xbf16>, vector<8x64xf32> -> vector<8x64xf32>
    %c0_55 = arith.constant 0 : index
    %c0_56 = arith.constant 0 : index
    %118 = vector.load %arg13[%c0_55, %c0_56] : memref<1x64xf32, #tpu.memory_space<vmem>>, vector<1x64xf32>
    %119 = vector.broadcast %118 : vector<1x64xf32> to vector<8x64xf32>
    %120 = arith.addf %117, %119 : vector<8x64xf32>
    %cst_57 = arith.constant 0.000000e+00 : f32
    %121 = vector.broadcast %cst_57 : f32 to vector<8x64xf32>
    %122 = arith.maximumf %120, %121 : vector<8x64xf32>
    %123 = arith.truncf %122 : vector<8x64xf32> to vector<8x64xbf16>
    %c0_58 = arith.constant 0 : index
    %c0_59 = arith.constant 0 : index
    %124 = vector.load %arg14[%c0_58, %c0_59] : memref<64x32xbf16, #tpu.memory_space<vmem>>, vector<64x32xbf16>
    %cst_60 = arith.constant dense<0.000000e+00> : vector<8x32xf32>
    %125 = tpu.matmul %123, %124, %cst_60 {dimension_numbers = #tpu.dot_dimension_numbers<[1], [0], [0], [1], [0, 0, 1, 1], [], []>} : vector<8x64xbf16>, vector<64x32xbf16>, vector<8x32xf32> -> vector<8x32xf32>
    %c0_61 = arith.constant 0 : index
    %c0_62 = arith.constant 0 : index
    %126 = vector.load %arg15[%c0_61, %c0_62] : memref<1x32xf32, #tpu.memory_space<vmem>>, vector<1x32xf32>
    %127 = vector.broadcast %126 : vector<1x32xf32> to vector<8x32xf32>
    %128 = arith.addf %125, %127 : vector<8x32xf32>
    %129 = arith.addf %92, %128 : vector<8x32xf32>
    %c0_63 = arith.constant 0 : index
    %c0_64 = arith.constant 0 : index
    %c0_65 = arith.constant 0 : index
    %130 = vector.load %arg16[%c0_63, %c0_64, %c0_65] : memref<1x8x32xf32, #tpu.memory_space<vmem>>, vector<1x8x32xf32>
    %131 = vector.shape_cast %130 : vector<1x8x32xf32> to vector<8x32xf32>
    %132 = vector.shape_cast %129 : vector<8x32xf32> to vector<1x8x32xf32>
    tpu.vector_store %arg16[%c0_63, %c0_64, %c0_65], %132 {strides = array<i32>} : memref<1x8x32xf32, #tpu.memory_space<vmem>>, vector<1x8x32xf32>,
    return
  }
  func.func @transform_0(%arg0: i32, %arg1: i32) -> (i32, i32, i32) {
    %c0_i32 = arith.constant 0 : i32
    %c0_i32_0 = arith.constant 0 : i32
    %c0_i32_1 = arith.constant 0 : i32
    return %arg0, %c0_i32, %c0_i32_0 : i32, i32, i32
  }
  func.func @transform_1(%arg0: i32, %arg1: i32) -> (i32, i32) {
    %c0_i32 = arith.constant 0 : i32
    %c0_i32_0 = arith.constant 0 : i32
    %c0_i32_1 = arith.constant 0 : i32
    return %c0_i32, %c0_i32_0 : i32, i32
  }
  func.func @transform_2(%arg0: i32, %arg1: i32) -> (i32, i32) {
    %c0_i32 = arith.constant 0 : i32
    %c0_i32_0 = arith.constant 0 : i32
    %c0_i32_1 = arith.constant 0 : i32
    return %c0_i32, %c0_i32_0 : i32, i32
  }
  func.func @transform_3(%arg0: i32, %arg1: i32) -> (i32, i32, i32) {
    %c0_i32 = arith.constant 0 : i32
    %c0_i32_0 = arith.constant 0 : i32
    %c0_i32_1 = arith.constant 0 : i32
    %c0_i32_2 = arith.constant 0 : i32
    return %c0_i32, %c0_i32_0, %c0_i32_1 : i32, i32, i32
  }
  func.func @transform_4(%arg0: i32, %arg1: i32) -> (i32, i32, i32) {
    %c0_i32 = arith.constant 0 : i32
    %c0_i32_0 = arith.constant 0 : i32
    %c0_i32_1 = arith.constant 0 : i32
    %c0_i32_2 = arith.constant 0 : i32
    return %c0_i32, %c0_i32_0, %c0_i32_1 : i32, i32, i32
  }
  func.func @transform_5(%arg0: i32, %arg1: i32) -> (i32, i32, i32) {
    %c0_i32 = arith.constant 0 : i32
    %c0_i32_0 = arith.constant 0 : i32
    %c0_i32_1 = arith.constant 0 : i32
    %c0_i32_2 = arith.constant 0 : i32
    return %c0_i32, %c0_i32_0, %c0_i32_1 : i32, i32, i32
  }
  func.func @transform_6(%arg0: i32, %arg1: i32) -> (i32, i32, i32) {
    %c0_i32 = arith.constant 0 : i32
    %c0_i32_0 = arith.constant 0 : i32
    %c0_i32_1 = arith.constant 0 : i32
    %c0_i32_2 = arith.constant 0 : i32
    return %c0_i32, %c0_i32_0, %c0_i32_1 : i32, i32, i32
  }
  func.func @transform_7(%arg0: i32, %arg1: i32) -> (i32, i32) {
    %c0_i32 = arith.constant 0 : i32
    %c0_i32_0 = arith.constant 0 : i32
    %c0_i32_1 = arith.constant 0 : i32
    return %c0_i32, %c0_i32_0 : i32, i32
  }
  func.func @transform_8(%arg0: i32, %arg1: i32) -> (i32, i32) {
    %c0_i32 = arith.constant 0 : i32
    %c0_i32_0 = arith.constant 0 : i32
    %c0_i32_1 = arith.constant 0 : i32
    return %c0_i32, %c0_i32_0 : i32, i32
  }
  func.func @transform_9(%arg0: i32, %arg1: i32) -> (i32, i32) {
    %c0_i32 = arith.constant 0 : i32
    %c0_i32_0 = arith.constant 0 : i32
    %c0_i32_1 = arith.constant 0 : i32
    return %c0_i32, %c0_i32_0 : i32, i32
  }
  func.func @transform_10(%arg0: i32, %arg1: i32) -> (i32, i32) {
    %c0_i32 = arith.constant 0 : i32
    %c0_i32_0 = arith.constant 0 : i32
    %c0_i32_1 = arith.constant 0 : i32
    return %c0_i32, %c0_i32_0 : i32, i32
  }
  func.func @transform_11(%arg0: i32, %arg1: i32) -> (i32, i32) {
    %c0_i32 = arith.constant 0 : i32
    %c0_i32_0 = arith.constant 0 : i32
    %c0_i32_1 = arith.constant 0 : i32
    return %c0_i32, %c0_i32_0 : i32, i32
  }
  func.func @transform_12(%arg0: i32, %arg1: i32) -> (i32, i32) {
    %c0_i32 = arith.constant 0 : i32
    %c0_i32_0 = arith.constant 0 : i32
    %c0_i32_1 = arith.constant 0 : i32
    return %c0_i32, %c0_i32_0 : i32, i32
  }
  func.func @transform_13(%arg0: i32, %arg1: i32) -> (i32, i32) {
    %c0_i32 = arith.constant 0 : i32
    %c0_i32_0 = arith.constant 0 : i32
    %c0_i32_1 = arith.constant 0 : i32
    return %c0_i32, %c0_i32_0 : i32, i32
  }
  func.func @transform_14(%arg0: i32, %arg1: i32) -> (i32, i32, i32) {
    %c0_i32 = arith.constant 0 : i32
    %c0_i32_0 = arith.constant 0 : i32
    return %arg0, %arg1, %c0_i32 : i32, i32, i32
  }
}

</mosaic_0001>

<llo_original>
// kernel: tpu_custom_call.1
$region0: #{tpu_custom_call.1}
  #allocation0 [shape = 'u32[]', space=smem, size = 0x4, offset = 0x4, fixed_abs, tag = 'smem constant byte address 0x4 - core index']
  #allocation1 [shape = 'u32[144,128]{1,0:T(1,128)}', space=vmem, size = 0x12000, scoped, tag = 'internal scratch']
  #allocation2 [shape = 'bf16[2,8,16]{2,1,0:T(8,128)(2,1)}', space=vmem, size = 0x1000, scoped, tag = 'scratch operand']
  #allocation3 [shape = 'bf16[2,8,16]{2,1,0:T(8,128)(2,1)}', space=vmem, size = 0x1000, scoped, tag = 'scratch operand']
  %s0 = inlined_call_operand.vmem [shape: f32[2,8,32], index: 0, kind: input, shape index: {}]
  %s1 = inlined_call_operand.vmem [shape: f32[1,32], index: 1, kind: input, shape index: {}]
  %s2 = inlined_call_operand.vmem [shape: f32[1,32], index: 2, kind: input, shape index: {}]
  %s3 = inlined_call_operand.vmem [shape: bf16[2,32,16], index: 3, kind: input, shape index: {}]
  %s4 = inlined_call_operand.vmem [shape: bf16[2,32,16], index: 4, kind: input, shape index: {}]
  %s5 = inlined_call_operand.vmem [shape: bf16[2,32,16], index: 5, kind: input, shape index: {}]
  %s6 = inlined_call_operand.vmem [shape: bf16[2,16,32], index: 6, kind: input, shape index: {}]
  %s7 = inlined_call_operand.vmem [shape: f32[1,32], index: 7, kind: input, shape index: {}]
  %s8 = inlined_call_operand.vmem [shape: f32[1,32], index: 8, kind: input, shape index: {}]
  %s9 = inlined_call_operand.vmem [shape: f32[1,32], index: 9, kind: input, shape index: {}]
  %s10 = inlined_call_operand.vmem [shape: bf16[32,64], index: 10, kind: input, shape index: {}]
  %s11 = inlined_call_operand.vmem [shape: f32[1,64], index: 11, kind: input, shape index: {}]
  %s12 = inlined_call_operand.vmem [shape: bf16[64,32], index: 12, kind: input, shape index: {}]
  %s13 = inlined_call_operand.vmem [shape: f32[1,32], index: 13, kind: input, shape index: {}]
  %s14 = inlined_call_operand.hbm [shape: f32[2,8,32], index: 14, kind: output, shape index: {}]
  %s15 = sld [smem:[#allocation0]]
  $region93: #{tpu_custom_call.1} parent=0
    _
  %s17 = ssub.s32 1, %s15
  %s18 = scalar_select 0, %s17, %s15
  $region1: #{tpu_custom_call.1} parent=0
    #allocation4 [shape = 'u8[8192]{0}', space=vmem, size = 0x2000, scoped, tag = 'output window, operand 0']
    #allocation5 [shape = 's32[2]{0}', space=sflag, size = 0x8, scoped, tag = 'scoped memory for tpu_custom_call.1']
    %19 = vsyncpa [#allocation5], 0
    %s20 = scalar_lea.sflag [#allocation5], 1
    %21 = vsyncpa %s20, 0
    loop: start=0, step=1, limit=4
    $region2: #{tpu_custom_call.1} parent=1 // loop_pre_header
      _
    $region3: #{tpu_custom_call.1} parent=1 // loop_header
      %s23 = sphi 0, %s27
      %p24 = scmp.ge.s32.totalorder %s23, 4
      %s30 = sphi 0, %s42
      %s31 = sphi 0, %s38
      %s32 = sphi 0, %s30
      %s33 = sphi 0, %s31
      %s34 = sphi 0, %s32
      %s35 = sphi 0, %s33
      %s45 = sphi 0, %s47
      %s48 = sphi 0, %s45
      %s49 = sphi 0, %s48
      %s65 = sphi 0, %s49
      %s69 = sphi 0, %s69
      %s71 = sphi 0, %s69
      %s72 = sphi 0, %s71
      %s86 = sphi 0, %s72
      %s90 = sphi 0, %s90
      %s92 = sphi 0, %s90
      %s93 = sphi 0, %s92
      %s107 = sphi 0, %s93
      %s111 = sphi 0, %s111
      %s113 = sphi 0, %s111
      %s114 = sphi 0, %s113
      %s128 = sphi 0, %s114
      %s132 = sphi 0, %s132
      %s134 = sphi 0, %s132
      %s135 = sphi 0, %s134
      %s149 = sphi 0, %s135
      %s153 = sphi 0, %s153
      %s155 = sphi 0, %s153
      %s156 = sphi 0, %s155
      %s170 = sphi 0, %s156
      %s174 = sphi 0, %s174
      %s176 = sphi 0, %s174
      %s177 = sphi 0, %s176
      %s191 = sphi 0, %s177
      %s195 = sphi 0, %s195
      %s197 = sphi 0, %s195
      %s198 = sphi 0, %s197
      %s212 = sphi 0, %s198
      %s216 = sphi 0, %s216
      %s218 = sphi 0, %s216
      %s219 = sphi 0, %s218
      %s233 = sphi 0, %s219
      %s237 = sphi 0, %s237
      %s239 = sphi 0, %s237
      %s240 = sphi 0, %s239
      %s254 = sphi 0, %s240
      %s258 = sphi 0, %s258
      %s260 = sphi 0, %s258
      %s261 = sphi 0, %s260
      %s275 = sphi 0, %s261
      %s279 = sphi 0, %s279
      %s281 = sphi 0, %s279
      %s282 = sphi 0, %s281
      %s296 = sphi 0, %s282
      %s300 = sphi 0, %s300
      %s302 = sphi 0, %s300
      %s303 = sphi 0, %s302
      %s317 = sphi 0, %s303
      %s321 = sphi 0, %s321
      %s323 = sphi 0, %s321
      %s324 = sphi 0, %s323
      %s338 = sphi 0, %s324
      %s346 = sphi 0, %s348
      %s349 = sphi 0, %s346
      %s350 = sphi 0, %s349
      %s366 = sphi 0, %s350
    $region4: #{tpu_custom_call.1} parent=1 // loop_header_branch
      %26 = sbr.rel (%p24) target = $region8
    $region5: #{tpu_custom_call.1} parent=1 // loop_body
      %s28 = ssub.s32 %s23, 1
      %s29 = ssub.s32 %s23, 2
      %s36 = sadd.s32 1, %s31
      %p37 = scmp.ge.s32.totalorder %s36, 1
      %s38 = scalar_select %p37, 0, %s36
      %s39 = sadd.s32 1, %s30
      %s40 = scalar_select %p37, %s39, %s30
      %p41 = scmp.ge.s32.totalorder %s40, 2
      %s42 = scalar_select %p41, 0, %s40
      %s43 = ssub.s32 %s30, %s42
      %p44 = scmp.eq.s32.totalorder %s43, 0
      %s46 = sadd.s32 %s45, 1
      %s47 = scalar_select %p44, %s45, %s46
      %p50 = pneg %p44
      %p51 = scmp.eq.s32.totalorder %s23, 1
      %p52 = por %p50, %p51
      %p53 = scmp.ne.s32.totalorder %s45, %s48
      %p54 = scmp.eq.s32.totalorder %s23, 0
      %p55 = por %p53, %p54
      %p56 = scmp.ne.s32.totalorder %s45, %s48
      %p57 = scmp.eq.s32.totalorder %s28, 1
      %p58 = por %p56, %p57
      %p59 = scmp.ne.s32.totalorder %s48, %s49
      %p60 = scmp.eq.s32.totalorder %s28, 0
      %p61 = por %p59, %p60
      %p62 = scmp.ne.s32.totalorder %s48, %s49
      %p63 = scmp.eq.s32.totalorder %s29, 1
      %p64 = por %p62, %p63
      %p66 = scmp.ne.s32.totalorder %s49, %s65
      %p67 = scmp.eq.s32.totalorder %s29, 0
      %p68 = por %p66, %p67
      %s70 = sadd.s32 %s69, 1
      %p73 = scmp.eq.s32.totalorder %s23, 1
      %p74 = scmp.ne.s32.totalorder %s69, %s71
      %p75 = scmp.eq.s32.totalorder %s23, 0
      %p76 = por %p74, %p75
      %p77 = scmp.ne.s32.totalorder %s69, %s71
      %p78 = scmp.eq.s32.totalorder %s28, 1
      %p79 = por %p77, %p78
      %p80 = scmp.ne.s32.totalorder %s71, %s72
      %p81 = scmp.eq.s32.totalorder %s28, 0
      %p82 = por %p80, %p81
      %p83 = scmp.ne.s32.totalorder %s71, %s72
      %p84 = scmp.eq.s32.totalorder %s29, 1
      %p85 = por %p83, %p84
      %p87 = scmp.ne.s32.totalorder %s72, %s86
      %p88 = scmp.eq.s32.totalorder %s29, 0
      %p89 = por %p87, %p88
      %s91 = sadd.s32 %s90, 1
      %p94 = scmp.eq.s32.totalorder %s23, 1
      %p95 = scmp.ne.s32.totalorder %s90, %s92
      %p96 = scmp.eq.s32.totalorder %s23, 0
      %p97 = por %p95, %p96
      %p98 = scmp.ne.s32.totalorder %s90, %s92
      %p99 = scmp.eq.s32.totalorder %s28, 1
      %p100 = por %p98, %p99
      %p101 = scmp.ne.s32.totalorder %s92, %s93
      %p102 = scmp.eq.s32.totalorder %s28, 0
      %p103 = por %p101, %p102
      %p104 = scmp.ne.s32.totalorder %s92, %s93
      %p105 = scmp.eq.s32.totalorder %s29, 1
      %p106 = por %p104, %p105
      %p108 = scmp.ne.s32.totalorder %s93, %s107
      %p109 = scmp.eq.s32.totalorder %s29, 0
      %p110 = por %p108, %p109
      %s112 = sadd.s32 %s111, 1
      %p115 = scmp.eq.s32.totalorder %s23, 1
      %p116 = scmp.ne.s32.totalorder %s111, %s113
      %p117 = scmp.eq.s32.totalorder %s23, 0
      %p118 = por %p116, %p117
      %p119 = scmp.ne.s32.totalorder %s111, %s113
      %p120 = scmp.eq.s32.totalorder %s28, 1
      %p121 = por %p119, %p120
      %p122 = scmp.ne.s32.totalorder %s113, %s114
      %p123 = scmp.eq.s32.totalorder %s28, 0
      %p124 = por %p122, %p123
      %p125 = scmp.ne.s32.totalorder %s113, %s114
      %p126 = scmp.eq.s32.totalorder %s29, 1
      %p127 = por %p125, %p126
      %p129 = scmp.ne.s32.totalorder %s114, %s128
      %p130 = scmp.eq.s32.totalorder %s29, 0
      %p131 = por %p129, %p130
      %s133 = sadd.s32 %s132, 1
      %p136 = scmp.eq.s32.totalorder %s23, 1
      %p137 = scmp.ne.s32.totalorder %s132, %s134
      %p138 = scmp.eq.s32.totalorder %s23, 0
      %p139 = por %p137, %p138
      %p140 = scmp.ne.s32.totalorder %s132, %s134
      %p141 = scmp.eq.s32.totalorder %s28, 1
      %p142 = por %p140, %p141
      %p143 = scmp.ne.s32.totalorder %s134, %s135
      %p144 = scmp.eq.s32.totalorder %s28, 0
      %p145 = por %p143, %p144
      %p146 = scmp.ne.s32.totalorder %s134, %s135
      %p147 = scmp.eq.s32.totalorder %s29, 1
      %p148 = por %p146, %p147
      %p150 = scmp.ne.s32.totalorder %s135, %s149
      %p151 = scmp.eq.s32.totalorder %s29, 0
      %p152 = por %p150, %p151
      %s154 = sadd.s32 %s153, 1
      %p157 = scmp.eq.s32.totalorder %s23, 1
      %p158 = scmp.ne.s32.totalorder %s153, %s155
      %p159 = scmp.eq.s32.totalorder %s23, 0
      %p160 = por %p158, %p159
      %p161 = scmp.ne.s32.totalorder %s153, %s155
      %p162 = scmp.eq.s32.totalorder %s28, 1
      %p163 = por %p161, %p162
      %p164 = scmp.ne.s32.totalorder %s155, %s156
      %p165 = scmp.eq.s32.totalorder %s28, 0
      %p166 = por %p164, %p165
      %p167 = scmp.ne.s32.totalorder %s155, %s156
      %p168 = scmp.eq.s32.totalorder %s29, 1
      %p169 = por %p167, %p168
      %p171 = scmp.ne.s32.totalorder %s156, %s170
      %p172 = scmp.eq.s32.totalorder %s29, 0
      %p173 = por %p171, %p172
      %s175 = sadd.s32 %s174, 1
      %p178 = scmp.eq.s32.totalorder %s23, 1
      %p179 = scmp.ne.s32.totalorder %s174, %s176
      %p180 = scmp.eq.s32.totalorder %s23, 0
      %p181 = por %p179, %p180
      %p182 = scmp.ne.s32.totalorder %s174, %s176
      %p183 = scmp.eq.s32.totalorder %s28, 1
      %p184 = por %p182, %p183
      %p185 = scmp.ne.s32.totalorder %s176, %s177
      %p186 = scmp.eq.s32.totalorder %s28, 0
      %p187 = por %p185, %p186
      %p188 = scmp.ne.s32.totalorder %s176, %s177
      %p189 = scmp.eq.s32.totalorder %s29, 1
      %p190 = por %p188, %p189
      %p192 = scmp.ne.s32.totalorder %s177, %s191
      %p193 = scmp.eq.s32.totalorder %s29, 0
      %p194 = por %p192, %p193
      %s196 = sadd.s32 %s195, 1
      %p199 = scmp.eq.s32.totalorder %s23, 1
      %p200 = scmp.ne.s32.totalorder %s195, %s197
      %p201 = scmp.eq.s32.totalorder %s23, 0
      %p202 = por %p200, %p201
      %p203 = scmp.ne.s32.totalorder %s195, %s197
      %p204 = scmp.eq.s32.totalorder %s28, 1
      %p205 = por %p203, %p204
      %p206 = scmp.ne.s32.totalorder %s197, %s198
      %p207 = scmp.eq.s32.totalorder %s28, 0
      %p208 = por %p206, %p207
      %p209 = scmp.ne.s32.totalorder %s197, %s198
      %p210 = scmp.eq.s32.totalorder %s29, 1
      %p211 = por %p209, %p210
      %p213 = scmp.ne.s32.totalorder %s198, %s212
      %p214 = scmp.eq.s32.totalorder %s29, 0
      %p215 = por %p213, %p214
      %s217 = sadd.s32 %s216, 1
      %p220 = scmp.eq.s32.totalorder %s23, 1
      %p221 = scmp.ne.s32.totalorder %s216, %s218
      %p222 = scmp.eq.s32.totalorder %s23, 0
      %p223 = por %p221, %p222
      %p224 = scmp.ne.s32.totalorder %s216, %s218
      %p225 = scmp.eq.s32.totalorder %s28, 1
      %p226 = por %p224, %p225
      %p227 = scmp.ne.s32.totalorder %s218, %s219
      %p228 = scmp.eq.s32.totalorder %s28, 0
      %p229 = por %p227, %p228
      %p230 = scmp.ne.s32.totalorder %s218, %s219
      %p231 = scmp.eq.s32.totalorder %s29, 1
      %p232 = por %p230, %p231
      %p234 = scmp.ne.s32.totalorder %s219, %s233
      %p235 = scmp.eq.s32.totalorder %s29, 0
      %p236 = por %p234, %p235
      %s238 = sadd.s32 %s237, 1
      %p241 = scmp.eq.s32.totalorder %s23, 1
      %p242 = scmp.ne.s32.totalorder %s237, %s239
      %p243 = scmp.eq.s32.totalorder %s23, 0
      %p244 = por %p242, %p243
      %p245 = scmp.ne.s32.totalorder %s237, %s239
      %p246 = scmp.eq.s32.totalorder %s28, 1
      %p247 = por %p245, %p246
      %p248 = scmp.ne.s32.totalorder %s239, %s240
      %p249 = scmp.eq.s32.totalorder %s28, 0
      %p250 = por %p248, %p249
      %p251 = scmp.ne.s32.totalorder %s239, %s240
      %p252 = scmp.eq.s32.totalorder %s29, 1
      %p253 = por %p251, %p252
      %p255 = scmp.ne.s32.totalorder %s240, %s254
      %p256 = scmp.eq.s32.totalorder %s29, 0
      %p257 = por %p255, %p256
      %s259 = sadd.s32 %s258, 1
      %p262 = scmp.eq.s32.totalorder %s23, 1
      %p263 = scmp.ne.s32.totalorder %s258, %s260
      %p264 = scmp.eq.s32.totalorder %s23, 0
      %p265 = por %p263, %p264
      %p266 = scmp.ne.s32.totalorder %s258, %s260
      %p267 = scmp.eq.s32.totalorder %s28, 1
      %p268 = por %p266, %p267
      %p269 = scmp.ne.s32.totalorder %s260, %s261
      %p270 = scmp.eq.s32.totalorder %s28, 0
      %p271 = por %p269, %p270
      %p272 = scmp.ne.s32.totalorder %s260, %s261
      %p273 = scmp.eq.s32.totalorder %s29, 1
      %p274 = por %p272, %p273
      %p276 = scmp.ne.s32.totalorder %s261, %s275
      %p277 = scmp.eq.s32.totalorder %s29, 0
      %p278 = por %p276, %p277
      %s280 = sadd.s32 %s279, 1
      %p283 = scmp.eq.s32.totalorder %s23, 1
      %p284 = scmp.ne.s32.totalorder %s279, %s281
      %p285 = scmp.eq.s32.totalorder %s23, 0
      %p286 = por %p284, %p285
      %p287 = scmp.ne.s32.totalorder %s279, %s281
      %p288 = scmp.eq.s32.totalorder %s28, 1
      %p289 = por %p287, %p288
      %p290 = scmp.ne.s32.totalorder %s281, %s282
      %p291 = scmp.eq.s32.totalorder %s28, 0
      %p292 = por %p290, %p291
      %p293 = scmp.ne.s32.totalorder %s281, %s282
      %p294 = scmp.eq.s32.totalorder %s29, 1
      %p295 = por %p293, %p294
      %p297 = scmp.ne.s32.totalorder %s282, %s296
      %p298 = scmp.eq.s32.totalorder %s29, 0
      %p299 = por %p297, %p298
      %s301 = sadd.s32 %s300, 1
      %p304 = scmp.eq.s32.totalorder %s23, 1
      %p305 = scmp.ne.s32.totalorder %s300, %s302
      %p306 = scmp.eq.s32.totalorder %s23, 0
      %p307 = por %p305, %p306
      %p308 = scmp.ne.s32.totalorder %s300, %s302
      %p309 = scmp.eq.s32.totalorder %s28, 1
      %p310 = por %p308, %p309
      %p311 = scmp.ne.s32.totalorder %s302, %s303
      %p312 = scmp.eq.s32.totalorder %s28, 0
      %p313 = por %p311, %p312
      %p314 = scmp.ne.s32.totalorder %s302, %s303
      %p315 = scmp.eq.s32.totalorder %s29, 1
      %p316 = por %p314, %p315
      %p318 = scmp.ne.s32.totalorder %s303, %s317
      %p319 = scmp.eq.s32.totalorder %s29, 0
      %p320 = por %p318, %p319
      %s322 = sadd.s32 %s321, 1
      %p325 = scmp.eq.s32.totalorder %s23, 1
      %p326 = scmp.ne.s32.totalorder %s321, %s323
      %p327 = scmp.eq.s32.totalorder %s23, 0
      %p328 = por %p326, %p327
      %p329 = scmp.ne.s32.totalorder %s321, %s323
      %p330 = scmp.eq.s32.totalorder %s28, 1
      %p331 = por %p329, %p330
      %p332 = scmp.ne.s32.totalorder %s323, %s324
      %p333 = scmp.eq.s32.totalorder %s28, 0
      %p334 = por %p332, %p333
      %p335 = scmp.ne.s32.totalorder %s323, %s324
      %p336 = scmp.eq.s32.totalorder %s29, 1
      %p337 = por %p335, %p336
      %p339 = scmp.ne.s32.totalorder %s324, %s338
      %p340 = scmp.eq.s32.totalorder %s29, 0
      %p341 = por %p339, %p340
      %s342 = ssub.s32 %s30, %s42
      %s343 = ssub.s32 %s31, %s38
      %s344 = sor.u32 %s342, %s343
      %p345 = scmp.eq.s32.totalorder %s344, 0
      %s347 = sadd.s32 %s346, 1
      %s348 = scalar_select %p345, %s346, %s347
      %p351 = pneg %p345
      %p352 = scmp.eq.s32.totalorder %s23, 1
      %p353 = por %p351, %p352
      %p354 = scmp.ne.s32.totalorder %s346, %s349
      %p355 = scmp.eq.s32.totalorder %s23, 0
      %p356 = por %p354, %p355
      %p357 = scmp.ne.s32.totalorder %s346, %s349
      %p358 = scmp.eq.s32.totalorder %s28, 1
      %p359 = por %p357, %p358
      %p360 = scmp.ne.s32.totalorder %s349, %s350
      %p361 = scmp.eq.s32.totalorder %s28, 0
      %p362 = por %p360, %p361
      %p363 = scmp.ne.s32.totalorder %s349, %s350
      %p364 = scmp.eq.s32.totalorder %s29, 1
      %p365 = por %p363, %p364
      %p367 = scmp.ne.s32.totalorder %s350, %s366
      %p368 = scmp.eq.s32.totalorder %s29, 0
      %p369 = por %p367, %p368
      %p370 = scmp.le.s32.totalorder 1, %s23
      %p371 = scmp.lt.s32.totalorder %s23, 3
      %p372 = pnand %p370, %p371
      %p373 = pneg %p372
      // Predicated region
      $region9: #{tpu_custom_call.1} parent=5 // pred_check
        _
      $region10: #{tpu_custom_call.1} parent=5 // pred_check_branch
        %375 = sbr.rel (%p372) target = $region12
      $region11: #{tpu_custom_call.1} parent=5 // pred_region
        %s376 = ssub.s32 %s23, 1
        // Predicated region
        $region13: #{tpu_custom_call.1} parent=11 // pred_check
          %p377 = pneg %p82
        $region14: #{tpu_custom_call.1} parent=11 // pred_check_branch
          %379 = sbr.rel (%p377) target = $region16
        $region15: #{tpu_custom_call.1} parent=11 // pred_region
          _
        $region16: #{tpu_custom_call.1} parent=11 // pred_fallthru
          _
        // Predicated region
        $region17: #{tpu_custom_call.1} parent=11 // pred_check
          %p380 = pneg %p103
        $region18: #{tpu_custom_call.1} parent=11 // pred_check_branch
          %382 = sbr.rel (%p380) target = $region20
        $region19: #{tpu_custom_call.1} parent=11 // pred_region
          _
        $region20: #{tpu_custom_call.1} parent=11 // pred_fallthru
          _
        // Predicated region
        $region21: #{tpu_custom_call.1} parent=11 // pred_check
          %p383 = pneg %p124
        $region22: #{tpu_custom_call.1} parent=11 // pred_check_branch
          %385 = sbr.rel (%p383) target = $region24
        $region23: #{tpu_custom_call.1} parent=11 // pred_region
          _
        $region24: #{tpu_custom_call.1} parent=11 // pred_fallthru
          _
        // Predicated region
        $region25: #{tpu_custom_call.1} parent=11 // pred_check
          %p386 = pneg %p145
        $region26: #{tpu_custom_call.1} parent=11 // pred_check_branch
          %388 = sbr.rel (%p386) target = $region28
        $region27: #{tpu_custom_call.1} parent=11 // pred_region
          _
        $region28: #{tpu_custom_call.1} parent=11 // pred_fallthru
          _
        // Predicated region
        $region29: #{tpu_custom_call.1} parent=11 // pred_check
          %p389 = pneg %p166
        $region30: #{tpu_custom_call.1} parent=11 // pred_check_branch
          %391 = sbr.rel (%p389) target = $region32
        $region31: #{tpu_custom_call.1} parent=11 // pred_region
          _
        $region32: #{tpu_custom_call.1} parent=11 // pred_fallthru
          _
        // Predicated region
        $region33: #{tpu_custom_call.1} parent=11 // pred_check
          %p392 = pneg %p187
        $region34: #{tpu_custom_call.1} parent=11 // pred_check_branch
          %394 = sbr.rel (%p392) target = $region36
        $region35: #{tpu_custom_call.1} parent=11 // pred_region
          _
        $region36: #{tpu_custom_call.1} parent=11 // pred_fallthru
          _
        // Predicated region
        $region37: #{tpu_custom_call.1} parent=11 // pred_check
          %p395 = pneg %p208
        $region38: #{tpu_custom_call.1} parent=11 // pred_check_branch
          %397 = sbr.rel (%p395) target = $region40
        $region39: #{tpu_custom_call.1} parent=11 // pred_region
          _
        $region40: #{tpu_custom_call.1} parent=11 // pred_fallthru
          _
        // Predicated region
        $region41: #{tpu_custom_call.1} parent=11 // pred_check
          %p398 = pneg %p229
        $region42: #{tpu_custom_call.1} parent=11 // pred_check_branch
          %400 = sbr.rel (%p398) target = $region44
        $region43: #{tpu_custom_call.1} parent=11 // pred_region
          _
        $region44: #{tpu_custom_call.1} parent=11 // pred_fallthru
          _
        // Predicated region
        $region45: #{tpu_custom_call.1} parent=11 // pred_check
          %p401 = pneg %p250
        $region46: #{tpu_custom_call.1} parent=11 // pred_check_branch
          %403 = sbr.rel (%p401) target = $region48
        $region47: #{tpu_custom_call.1} parent=11 // pred_region
          _
        $region48: #{tpu_custom_call.1} parent=11 // pred_fallthru
          _
        // Predicated region
        $region49: #{tpu_custom_call.1} parent=11 // pred_check
          %p404 = pneg %p271
        $region50: #{tpu_custom_call.1} parent=11 // pred_check_branch
          %406 = sbr.rel (%p404) target = $region52
        $region51: #{tpu_custom_call.1} parent=11 // pred_region
          _
        $region52: #{tpu_custom_call.1} parent=11 // pred_fallthru
          _
        // Predicated region
        $region53: #{tpu_custom_call.1} parent=11 // pred_check
          %p407 = pneg %p292
        $region54: #{tpu_custom_call.1} parent=11 // pred_check_branch
          %409 = sbr.rel (%p407) target = $region56
        $region55: #{tpu_custom_call.1} parent=11 // pred_region
          _
        $region56: #{tpu_custom_call.1} parent=11 // pred_fallthru
          _
        // Predicated region
        $region57: #{tpu_custom_call.1} parent=11 // pred_check
          %p410 = pneg %p313
        $region58: #{tpu_custom_call.1} parent=11 // pred_check_branch
          %412 = sbr.rel (%p410) target = $region60
        $region59: #{tpu_custom_call.1} parent=11 // pred_region
          _
        $region60: #{tpu_custom_call.1} parent=11 // pred_fallthru
          _
        // Predicated region
        $region61: #{tpu_custom_call.1} parent=11 // pred_check
          %p413 = pneg %p334
        $region62: #{tpu_custom_call.1} parent=11 // pred_check_branch
          %415 = sbr.rel (%p413) target = $region64
        $region63: #{tpu_custom_call.1} parent=11 // pred_region
          _
        $region64: #{tpu_custom_call.1} parent=11 // pred_fallthru
          _
      $region12: #{tpu_custom_call.1} parent=5 // pred_fallthru
        _
      %p416 = scmp.lt.s32.totalorder %s23, 2
      // Predicated region
      $region65: #{tpu_custom_call.1} parent=5 // pred_check
        %p417 = pneg %p416
      $region66: #{tpu_custom_call.1} parent=5 // pred_check_branch
        %419 = sbr.rel (%p417) target = $region68
      $region67: #{tpu_custom_call.1} parent=5 // pred_region
        // Predicated region
        $region69: #{tpu_custom_call.1} parent=67 // pred_check
          %p420 = pneg %p55
        $region70: #{tpu_custom_call.1} parent=67 // pred_check_branch
          %422 = sbr.rel (%p420) target = $region72
        $region71: #{tpu_custom_call.1} parent=67 // pred_region
          %p423 = scmp.lt.s32.totalorder %s30, 1
          %s424 = scalar_select %p423, %s30, 1
          %s425 = smul.addr %s424, 8
          %s426 = scalar_lea.vmem %s0, %s425
        $region72: #{tpu_custom_call.1} parent=67 // pred_fallthru
          _
      $region68: #{tpu_custom_call.1} parent=5 // pred_fallthru
        _
      %p427 = scmp.le.s32.totalorder 1, %s23
      %p428 = scmp.lt.s32.totalorder %s23, 3
      %p429 = pnand %p427, %p428
      %p430 = pneg %p429
      // Predicated region
      $region73: #{tpu_custom_call.1} parent=5 // pred_check
        _
      $region74: #{tpu_custom_call.1} parent=5 // pred_check_branch
        %432 = sbr.rel (%p429) target = $region76
      $region75: #{tpu_custom_call.1} parent=5 // pred_region
        %s433 = ssub.s32 %s23, 1
        %p434 = scmp.lt.s32.totalorder %s32, 1
        %s435 = scalar_select %p434, %s32, 1
        %s436 = smul.addr %s435, 8
        %s437 = scalar_lea.vmem %s0, %s436
        %p438 = pneg %p61
        %p439 = pneg %p58
        %p440 = pneg %p82
        %p441 = pneg %p79
        %p442 = pneg %p103
        %p443 = pneg %p100
        %p444 = pneg %p124
        %p445 = pneg %p121
        %p446 = pneg %p145
        %p447 = pneg %p142
        %p448 = pneg %p166
        %p449 = pneg %p163
        %p450 = pneg %p187
        %p451 = pneg %p184
        %p452 = pneg %p208
        %p453 = pneg %p205
        %p454 = pneg %p229
        %p455 = pneg %p226
        %p456 = pneg %p250
        %p457 = pneg %p247
        %p458 = pneg %p271
        %p459 = pneg %p268
        %p460 = pneg %p292
        %p461 = pneg %p289
        %p462 = pneg %p313
        %p463 = pneg %p310
        %p464 = pneg %p334
        %p465 = pneg %p331
        %p466 = pneg %p362
        %p467 = pneg %p359
        %s468 = sand.u32 %s349, 1
        %s469 = scalar_lea.sflag [#allocation5], %s468
        %s470 = sand.u32 %s349, 1
        %s471 = smul.addr %s470, 8
        %s472 = scalar_lea.vmem [#allocation4], %s471
        %p473 = scmp.lt.s32.totalorder %s32, 1
        %s474 = scalar_select %p473, %s32, 1
        %s475 = smul.addr %s474, 8
        %s476 = scalar_lea.vmem %s0, %s475
        %p478 = scmp.eq.s32.totalorder %s33, 0
        // Predicated region
        $region77: #{tpu_custom_call.1} parent=75 // pred_check
          %p479 = pneg %p478
        $region78: #{tpu_custom_call.1} parent=75 // pred_check_branch
          %481 = sbr.rel (%p479) target = $region80
        $region79: #{tpu_custom_call.1} parent=75 // pred_region
          %v482 = vld [vmem:[%s476] sm:$0xff]
          %v483 = vld [vmem:[%s1] sm:$0x1]
          %v484 = vld [vmem:[%s2] sm:$0x1]
          %vm485 = vcmask 261120
          %v486 = vsel %vm485, %v482, 0.0
          %487 = vadd.xlane.f32.xlu0 %v486
          %v488 = vpop.xlane.xlu0 %487
          %v489 = vrcp.pop 32.0
          %v490 = vmul.f32 %v488, %v489
          %v491 = vsub.f32 %v482, %v490
          %v492 = vmul.f32 %v491, %v491
          %v493 = vsel %vm485, %v492, 0.0
          %494 = vadd.xlane.f32.xlu0 %v493
          %v495 = vpop.xlane.xlu0 %494
          %v496 = vmul.f32 %v495, %v489
          %v497 = vadd.f32 %v496, 1e-05
          %v498 = vrsqrt.pop %v497
          %v499 = vmul.f32 %v491, %v498
          %v501 = vlaneseq
          %v502 = vshrl.u32 %v501, 7
          %v503 = vsub.s32 0, %v502
          %v504 = vrot.slane %v483, %v503
          %v506 = vmul.f32 %v499, %v504
          %v508 = vlaneseq
          %v509 = vshrl.u32 %v508, 7
          %v510 = vsub.s32 0, %v509
          %v511 = vrot.slane %v484, %v510
          %v513 = vadd.f32 %v506, %v511
          %v514 = vpack.c.bf16 %v513, %v513
          %v515 = vld [vmem:[%s4] sm:$0xf]
          %v516 = vld [vmem:[%s4 + $0x4] sm:$0xf]
          %v517 = vld [vmem:[%s4 + $0x8] sm:$0xf]
          %v518 = vld [vmem:[%s4 + $0xc] sm:$0xf]
          %v523 = vunpack.c.l.b16 %v515
          %v524 = vunpack.c.l.b16 %v516
          %v525 = vunpack.c.l.b16 %v517
          %v526 = vunpack.c.l.b16 %v518
          %v527 = vpack.c.b16 %v524, %v523
          %v528 = vpack.c.b16 %v526, %v525
          %v532 = vsel %vm485, %v514, 0
          %534 = vmatprep.subr.bf16.mxu0 0
          %535 = vmatpush1.bf16.msra.mxu0 %v527
          %536 = vmatprep.subr.bf16.mxu0 0
          %537 = vmatpush1.bf16.msra.mxu0 %v528
          %538 = vmatprep.subr.bf16.mxu0 0
          %539 = vmatpush1.bf16.msra.mxu0 0
          %540 = vmatprep.subr.bf16.mxu0 0
          %541 = vmatpush1.bf16.msra.mxu0 0
          %542 = vmatprep.subr.bf16.mxu0 0
          %543 = vmatpush1.bf16.msra.mxu0 0
          %544 = vmatprep.subr.bf16.mxu0 0
          %545 = vmatpush1.bf16.msra.mxu0 0
          %546 = vmatprep.subr.bf16.mxu0 0
          %547 = vmatpush1.bf16.msra.mxu0 0
          %548 = vmatprep.subr.bf16.mxu0 0
          %549 = vmatpush1.bf16.msra.mxu0 0
          %550 = vmatprep.subr.bf16.mxu0 0
          %551 = vmatpush1.bf16.msra.mxu0 0
          %552 = vmatprep.subr.bf16.mxu0 0
          %553 = vmatpush1.bf16.msra.mxu0 0
          %554 = vmatprep.subr.bf16.mxu0 0
          %555 = vmatpush1.bf16.msra.mxu0 0
          %556 = vmatprep.subr.bf16.mxu0 0
          %557 = vmatpush1.bf16.msra.mxu0 0
          %558 = vmatprep.subr.bf16.mxu0 0
          %559 = vmatpush1.bf16.msra.mxu0 0
          %560 = vmatprep.subr.bf16.mxu0 0
          %561 = vmatpush1.bf16.msra.mxu0 0
          %562 = vmatprep.subr.bf16.mxu0 0
          %563 = vmatpush1.bf16.msra.mxu0 0
          %564 = vmatprep.subr.bf16.mxu0 0
          %565 = vmatpush1.bf16.msra.mxu0 0
          %566 = vmatprep.mubr.bf16.mxu0 0
          %567 = vmatmul.mubr.bf16.gmra.mrb[0].mxu0 %v532
          %v568 = vpop.f32.mrb[0].mxu0
          %v569 = vadd.f32 0.0, %v568
          %v570 = vpop.f32.mrb[0].mxu0
          %v571 = vpop.f32.mrb[0].mxu0
          %v572 = vpop.f32.mrb[0].mxu0
          %573 = vdwg.mxu0
          %v574 = vpack.c.bf16 %v569, %v569
          %vm575 = vcmask 125952
          %576 = vst.msk [vmem:[#allocation2] sm:$0xf] %vm575, %v574
          %v577 = vld [vmem:[%s5] sm:$0xf]
          %v578 = vld [vmem:[%s5 + $0x4] sm:$0xf]
          %v579 = vld [vmem:[%s5 + $0x8] sm:$0xf]
          %v580 = vld [vmem:[%s5 + $0xc] sm:$0xf]
          %v585 = vunpack.c.l.b16 %v577
          %v586 = vunpack.c.l.b16 %v578
          %v587 = vunpack.c.l.b16 %v579
          %v588 = vunpack.c.l.b16 %v580
          %v589 = vpack.c.b16 %v586, %v585
          %v590 = vpack.c.b16 %v588, %v587
          %593 = vmatprep.subr.bf16.mxu0 0
          %594 = vmatpush1.bf16.msra.mxu0 %v589
          %595 = vmatprep.subr.bf16.mxu0 0
          %596 = vmatpush1.bf16.msra.mxu0 %v590
          %597 = vmatprep.subr.bf16.mxu0 0
          %598 = vmatpush1.bf16.msra.mxu0 0
          %599 = vmatprep.subr.bf16.mxu0 0
          %600 = vmatpush1.bf16.msra.mxu0 0
          %601 = vmatprep.subr.bf16.mxu0 0
          %602 = vmatpush1.bf16.msra.mxu0 0
          %603 = vmatprep.subr.bf16.mxu0 0
          %604 = vmatpush1.bf16.msra.mxu0 0
          %605 = vmatprep.subr.bf16.mxu0 0
          %606 = vmatpush1.bf16.msra.mxu0 0
          %607 = vmatprep.subr.bf16.mxu0 0
          %608 = vmatpush1.bf16.msra.mxu0 0
          %609 = vmatprep.subr.bf16.mxu0 0
          %610 = vmatpush1.bf16.msra.mxu0 0
          %611 = vmatprep.subr.bf16.mxu0 0
          %612 = vmatpush1.bf16.msra.mxu0 0
          %613 = vmatprep.subr.bf16.mxu0 0
          %614 = vmatpush1.bf16.msra.mxu0 0
          %615 = vmatprep.subr.bf16.mxu0 0
          %616 = vmatpush1.bf16.msra.mxu0 0
          %617 = vmatprep.subr.bf16.mxu0 0
          %618 = vmatpush1.bf16.msra.mxu0 0
          %619 = vmatprep.subr.bf16.mxu0 0
          %620 = vmatpush1.bf16.msra.mxu0 0
          %621 = vmatprep.subr.bf16.mxu0 0
          %622 = vmatpush1.bf16.msra.mxu0 0
          %623 = vmatprep.subr.bf16.mxu0 0
          %624 = vmatpush1.bf16.msra.mxu0 0
          %625 = vmatprep.mubr.bf16.mxu0 0
          %626 = vmatmul.mubr.bf16.gmra.mrb[0].mxu0 %v532
          %v627 = vpop.f32.mrb[0].mxu0
          %v628 = vadd.f32 0.0, %v627
          %v629 = vpop.f32.mrb[0].mxu0
          %v630 = vpop.f32.mrb[0].mxu0
          %v631 = vpop.f32.mrb[0].mxu0
          %632 = vdwg.mxu0
          %v633 = vpack.c.bf16 %v628, %v628
          %634 = vst.msk [vmem:[#allocation3] sm:$0xf] %vm575, %v633
          %s635 = scalar_lea.vmem %s4, 16
          %v636 = vld [vmem:[%s635] sm:$0xf]
          %v637 = vld [vmem:[%s635 + $0x4] sm:$0xf]
          %v638 = vld [vmem:[%s635 + $0x8] sm:$0xf]
          %v639 = vld [vmem:[%s635 + $0xc] sm:$0xf]
          %v644 = vunpack.c.l.b16 %v636
          %v645 = vunpack.c.l.b16 %v637
          %v646 = vunpack.c.l.b16 %v638
          %v647 = vunpack.c.l.b16 %v639
          %v648 = vpack.c.b16 %v645, %v644
          %v649 = vpack.c.b16 %v647, %v646
          %652 = vmatprep.subr.bf16.mxu0 0
          %653 = vmatpush1.bf16.msra.mxu0 %v648
          %654 = vmatprep.subr.bf16.mxu0 0
          %655 = vmatpush1.bf16.msra.mxu0 %v649
          %656 = vmatprep.subr.bf16.mxu0 0
          %657 = vmatpush1.bf16.msra.mxu0 0
          %658 = vmatprep.subr.bf16.mxu0 0
          %659 = vmatpush1.bf16.msra.mxu0 0
          %660 = vmatprep.subr.bf16.mxu0 0
          %661 = vmatpush1.bf16.msra.mxu0 0
          %662 = vmatprep.subr.bf16.mxu0 0
          %663 = vmatpush1.bf16.msra.mxu0 0
          %664 = vmatprep.subr.bf16.mxu0 0
          %665 = vmatpush1.bf16.msra.mxu0 0
          %666 = vmatprep.subr.bf16.mxu0 0
          %667 = vmatpush1.bf16.msra.mxu0 0
          %668 = vmatprep.subr.bf16.mxu0 0
          %669 = vmatpush1.bf16.msra.mxu0 0
          %670 = vmatprep.subr.bf16.mxu0 0
          %671 = vmatpush1.bf16.msra.mxu0 0
          %672 = vmatprep.subr.bf16.mxu0 0
          %673 = vmatpush1.bf16.msra.mxu0 0
          %674 = vmatprep.subr.bf16.mxu0 0
          %675 = vmatpush1.bf16.msra.mxu0 0
          %676 = vmatprep.subr.bf16.mxu0 0
          %677 = vmatpush1.bf16.msra.mxu0 0
          %678 = vmatprep.subr.bf16.mxu0 0
          %679 = vmatpush1.bf16.msra.mxu0 0
          %680 = vmatprep.subr.bf16.mxu0 0
          %681 = vmatpush1.bf16.msra.mxu0 0
          %682 = vmatprep.subr.bf16.mxu0 0
          %683 = vmatpush1.bf16.msra.mxu0 0
          %684 = vmatprep.mubr.bf16.mxu0 0
          %685 = vmatmul.mubr.bf16.gmra.mrb[0].mxu0 %v532
          %v686 = vpop.f32.mrb[0].mxu0
          %v687 = vadd.f32 0.0, %v686
          %v688 = vpop.f32.mrb[0].mxu0
          %v689 = vpop.f32.mrb[0].mxu0
          %v690 = vpop.f32.mrb[0].mxu0
          %691 = vdwg.mxu0
          %v692 = vpack.c.bf16 %v687, %v687
          %s693 = scalar_lea.vmem [#allocation2], 4
          %694 = vst.msk [vmem:[%s693] sm:$0xf] %vm575, %v692
          %s695 = scalar_lea.vmem %s5, 16
          %v696 = vld [vmem:[%s695] sm:$0xf]
          %v697 = vld [vmem:[%s695 + $0x4] sm:$0xf]
          %v698 = vld [vmem:[%s695 + $0x8] sm:$0xf]
          %v699 = vld [vmem:[%s695 + $0xc] sm:$0xf]
          %v704 = vunpack.c.l.b16 %v696
          %v705 = vunpack.c.l.b16 %v697
          %v706 = vunpack.c.l.b16 %v698
          %v707 = vunpack.c.l.b16 %v699
          %v708 = vpack.c.b16 %v705, %v704
          %v709 = vpack.c.b16 %v707, %v706
          %712 = vmatprep.subr.bf16.mxu0 0
          %713 = vmatpush1.bf16.msra.mxu0 %v708
          %714 = vmatprep.subr.bf16.mxu0 0
          %715 = vmatpush1.bf16.msra.mxu0 %v709
          %716 = vmatprep.subr.bf16.mxu0 0
          %717 = vmatpush1.bf16.msra.mxu0 0
          %718 = vmatprep.subr.bf16.mxu0 0
          %719 = vmatpush1.bf16.msra.mxu0 0
          %720 = vmatprep.subr.bf16.mxu0 0
          %721 = vmatpush1.bf16.msra.mxu0 0
          %722 = vmatprep.subr.bf16.mxu0 0
          %723 = vmatpush1.bf16.msra.mxu0 0
          %724 = vmatprep.subr.bf16.mxu0 0
          %725 = vmatpush1.bf16.msra.mxu0 0
          %726 = vmatprep.subr.bf16.mxu0 0
          %727 = vmatpush1.bf16.msra.mxu0 0
          %728 = vmatprep.subr.bf16.mxu0 0
          %729 = vmatpush1.bf16.msra.mxu0 0
          %730 = vmatprep.subr.bf16.mxu0 0
          %731 = vmatpush1.bf16.msra.mxu0 0
          %732 = vmatprep.subr.bf16.mxu0 0
          %733 = vmatpush1.bf16.msra.mxu0 0
          %734 = vmatprep.subr.bf16.mxu0 0
          %735 = vmatpush1.bf16.msra.mxu0 0
          %736 = vmatprep.subr.bf16.mxu0 0
          %737 = vmatpush1.bf16.msra.mxu0 0
          %738 = vmatprep.subr.bf16.mxu0 0
          %739 = vmatpush1.bf16.msra.mxu0 0
          %740 = vmatprep.subr.bf16.mxu0 0
          %741 = vmatpush1.bf16.msra.mxu0 0
          %742 = vmatprep.subr.bf16.mxu0 0
          %743 = vmatpush1.bf16.msra.mxu0 0
          %744 = vmatprep.mubr.bf16.mxu0 0
          %745 = vmatmul.mubr.bf16.gmra.mrb[0].mxu0 %v532
          %v746 = vpop.f32.mrb[0].mxu0
          %v747 = vadd.f32 0.0, %v746
          %v748 = vpop.f32.mrb[0].mxu0
          %v749 = vpop.f32.mrb[0].mxu0
          %v750 = vpop.f32.mrb[0].mxu0
          %751 = vdwg.mxu0
          %v752 = vpack.c.bf16 %v747, %v747
          %s753 = scalar_lea.vmem [#allocation3], 4
          %754 = vst.msk [vmem:[%s753] sm:$0xf] %vm575, %v752
        $region80: #{tpu_custom_call.1} parent=75 // pred_fallthru
          _
        %v755 = vld [vmem:[%s476] sm:$0xff]
        %v756 = vld [vmem:[%s1] sm:$0x1]
        %v757 = vld [vmem:[%s2] sm:$0x1]
        %vm758 = vcmask 261120
        %v759 = vsel %vm758, %v755, 0.0
        %760 = vadd.xlane.f32.xlu0 %v759
        %v761 = vpop.xlane.xlu0 %760
        %v762 = vrcp.pop 32.0
        %v763 = vmul.f32 %v761, %v762
        %v764 = vsub.f32 %v755, %v763
        %v765 = vmul.f32 %v764, %v764
        %v766 = vsel %vm758, %v765, 0.0
        %767 = vadd.xlane.f32.xlu0 %v766
        %v768 = vpop.xlane.xlu0 %767
        %v769 = vmul.f32 %v768, %v762
        %v770 = vadd.f32 %v769, 1e-05
        %v771 = vrsqrt.pop %v770
        %v772 = vmul.f32 %v764, %v771
        %v774 = vlaneseq
        %v775 = vshrl.u32 %v774, 7
        %v776 = vsub.s32 0, %v775
        %v777 = vrot.slane %v756, %v776
        %v779 = vmul.f32 %v772, %v777
        %v781 = vlaneseq
        %v782 = vshrl.u32 %v781, 7
        %v783 = vsub.s32 0, %v782
        %v784 = vrot.slane %v757, %v783
        %v786 = vadd.f32 %v779, %v784
        %v787 = vpack.c.bf16 %v786, %v786
        %v788 = vld [vmem:[%s3] sm:$0xf]
        %v789 = vld [vmem:[%s3 + $0x4] sm:$0xf]
        %v790 = vld [vmem:[%s3 + $0x8] sm:$0xf]
        %v791 = vld [vmem:[%s3 + $0xc] sm:$0xf]
        %v796 = vunpack.c.l.b16 %v788
        %v797 = vunpack.c.l.b16 %v789
        %v798 = vunpack.c.l.b16 %v790
        %v799 = vunpack.c.l.b16 %v791
        %v800 = vpack.c.b16 %v797, %v796
        %v801 = vpack.c.b16 %v799, %v798
        %v805 = vsel %vm758, %v787, 0
        %807 = vmatprep.subr.bf16.mxu0 0
        %808 = vmatpush1.bf16.msra.mxu0 %v800
        %809 = vmatprep.subr.bf16.mxu0 0
        %810 = vmatpush1.bf16.msra.mxu0 %v801
        %811 = vmatprep.subr.bf16.mxu0 0
        %812 = vmatpush1.bf16.msra.mxu0 0
        %813 = vmatprep.subr.bf16.mxu0 0
        %814 = vmatpush1.bf16.msra.mxu0 0
        %815 = vmatprep.subr.bf16.mxu0 0
        %816 = vmatpush1.bf16.msra.mxu0 0
        %817 = vmatprep.subr.bf16.mxu0 0
        %818 = vmatpush1.bf16.msra.mxu0 0
        %819 = vmatprep.subr.bf16.mxu0 0
        %820 = vmatpush1.bf16.msra.mxu0 0
        %821 = vmatprep.subr.bf16.mxu0 0
        %822 = vmatpush1.bf16.msra.mxu0 0
        %823 = vmatprep.subr.bf16.mxu0 0
        %824 = vmatpush1.bf16.msra.mxu0 0
        %825 = vmatprep.subr.bf16.mxu0 0
        %826 = vmatpush1.bf16.msra.mxu0 0
        %827 = vmatprep.subr.bf16.mxu0 0
        %828 = vmatpush1.bf16.msra.mxu0 0
        %829 = vmatprep.subr.bf16.mxu0 0
        %830 = vmatpush1.bf16.msra.mxu0 0
        %831 = vmatprep.subr.bf16.mxu0 0
        %832 = vmatpush1.bf16.msra.mxu0 0
        %833 = vmatprep.subr.bf16.mxu0 0
        %834 = vmatpush1.bf16.msra.mxu0 0
        %835 = vmatprep.subr.bf16.mxu0 0
        %836 = vmatpush1.bf16.msra.mxu0 0
        %837 = vmatprep.subr.bf16.mxu0 0
        %838 = vmatpush1.bf16.msra.mxu0 0
        %839 = vmatprep.mubr.bf16.mxu0 0
        %840 = vmatmul.mubr.bf16.gmra.mrb[0].mxu0 %v805
        %v841 = vpop.f32.mrb[0].mxu0
        %v842 = vadd.f32 0.0, %v841
        %v843 = vpop.f32.mrb[0].mxu0
        %v844 = vpop.f32.mrb[0].mxu0
        %v845 = vpop.f32.mrb[0].mxu0
        %846 = vdwg.mxu0
        %v847 = vpack.c.bf16 %v842, %v842
        %v848 = vld [vmem:[#allocation2] sm:$0xf]
        %vm849 = vcmask 130048
        %v851 = vsel %vm849, %v847, 0
        %v854 = vsel %vm849, %v848, 0
        %856 = vmatprep.subr.bf16.mxu0 0
        %857 = vmatpush1.bf16.xpose.msra.mxu0 %v854
        %858 = vmatprep.subr.bf16.mxu0 0
        %859 = vmatpush1.bf16.xpose.msra.mxu0 0
        %860 = vmatprep.subr.bf16.mxu0 0
        %861 = vmatpush1.bf16.xpose.msra.mxu0 0
        %862 = vmatprep.subr.bf16.mxu0 0
        %863 = vmatpush1.bf16.xpose.msra.mxu0 0
        %864 = vmatprep.subr.bf16.mxu0 0
        %865 = vmatpush1.bf16.xpose.msra.mxu0 0
        %866 = vmatprep.subr.bf16.mxu0 0
        %867 = vmatpush1.bf16.xpose.msra.mxu0 0
        %868 = vmatprep.subr.bf16.mxu0 0
        %869 = vmatpush1.bf16.xpose.msra.mxu0 0
        %870 = vmatprep.subr.bf16.mxu0 0
        %871 = vmatpush1.bf16.xpose.msra.mxu0 0
        %872 = vmatprep.subr.bf16.mxu0 0
        %873 = vmatpush1.bf16.xpose.msra.mxu0 0
        %874 = vmatprep.subr.bf16.mxu0 0
        %875 = vmatpush1.bf16.xpose.msra.mxu0 0
        %876 = vmatprep.subr.bf16.mxu0 0
        %877 = vmatpush1.bf16.xpose.msra.mxu0 0
        %878 = vmatprep.subr.bf16.mxu0 0
        %879 = vmatpush1.bf16.xpose.msra.mxu0 0
        %880 = vmatprep.subr.bf16.mxu0 0
        %881 = vmatpush1.bf16.xpose.msra.mxu0 0
        %882 = vmatprep.subr.bf16.mxu0 0
        %883 = vmatpush1.bf16.xpose.msra.mxu0 0
        %884 = vmatprep.subr.bf16.mxu0 0
        %885 = vmatpush1.bf16.xpose.msra.mxu0 0
        %886 = vmatprep.subr.bf16.mxu0 0
        %887 = vmatpush1.bf16.xpose.msra.mxu0 0
        %888 = vmatprep.mubr.bf16.mxu0 0
        %889 = vmatmul.mubr.bf16.gmra.mrb[0].mxu0 %v851
        %v890 = vpop.f32.mrb[0].mxu0
        %v891 = vadd.f32 0.0, %v890
        %v892 = vpop.f32.mrb[0].mxu0
        %v893 = vpop.f32.mrb[0].mxu0
        %v894 = vpop.f32.mrb[0].mxu0
        %895 = vdwg.mxu0
        %vm896 = vcmask 64512
        %v897 = vsel %vm896, %v891, -inf
        %898 = vmax.xlane.f32.xlu0 %v897
        %v899 = vpop.xlane.xlu0 %898
        %v900 = vsub.f32 %v891, %v899
        %v901 = vmul.f32 %v900, 1.442695
        %v902 = vpow.pop %v901
        %v903 = vsel %vm896, %v902, 0.0
        %904 = vadd.xlane.f32.xlu0 %v903
        %v905 = vpop.xlane.xlu0 %904
        %v906 = vrcp.pop %v905
        %v907 = vmul.f32 %v902, %v906
        %v908 = vpack.c.bf16 %v907, %v907
        %v909 = vld [vmem:[#allocation3] sm:$0xf]
        %v911 = vsel %vm896, %v908, 0
        %vm913 = vcmask 1043456
        %v915 = vsel %vm913, %v909, 0
        %917 = vmatprep.subr.bf16.mxu0 0
        %918 = vmatpush1.bf16.msra.mxu0 %v915
        %919 = vmatprep.subr.bf16.mxu0 0
        %920 = vmatpush1.bf16.msra.mxu0 0
        %921 = vmatprep.subr.bf16.mxu0 0
        %922 = vmatpush1.bf16.msra.mxu0 0
        %923 = vmatprep.subr.bf16.mxu0 0
        %924 = vmatpush1.bf16.msra.mxu0 0
        %925 = vmatprep.subr.bf16.mxu0 0
        %926 = vmatpush1.bf16.msra.mxu0 0
        %927 = vmatprep.subr.bf16.mxu0 0
        %928 = vmatpush1.bf16.msra.mxu0 0
        %929 = vmatprep.subr.bf16.mxu0 0
        %930 = vmatpush1.bf16.msra.mxu0 0
        %931 = vmatprep.subr.bf16.mxu0 0
        %932 = vmatpush1.bf16.msra.mxu0 0
        %933 = vmatprep.subr.bf16.mxu0 0
        %934 = vmatpush1.bf16.msra.mxu0 0
        %935 = vmatprep.subr.bf16.mxu0 0
        %936 = vmatpush1.bf16.msra.mxu0 0
        %937 = vmatprep.subr.bf16.mxu0 0
        %938 = vmatpush1.bf16.msra.mxu0 0
        %939 = vmatprep.subr.bf16.mxu0 0
        %940 = vmatpush1.bf16.msra.mxu0 0
        %941 = vmatprep.subr.bf16.mxu0 0
        %942 = vmatpush1.bf16.msra.mxu0 0
        %943 = vmatprep.subr.bf16.mxu0 0
        %944 = vmatpush1.bf16.msra.mxu0 0
        %945 = vmatprep.subr.bf16.mxu0 0
        %946 = vmatpush1.bf16.msra.mxu0 0
        %947 = vmatprep.subr.bf16.mxu0 0
        %948 = vmatpush1.bf16.msra.mxu0 0
        %949 = vmatprep.mubr.bf16.mxu0 0
        %950 = vmatmul.mubr.bf16.gmra.mrb[0].mxu0 %v911
        %v951 = vpop.f32.mrb[0].mxu0
        %v952 = vadd.f32 0.0, %v951
        %v953 = vpop.f32.mrb[0].mxu0
        %v954 = vpop.f32.mrb[0].mxu0
        %v955 = vpop.f32.mrb[0].mxu0
        %956 = vdwg.mxu0
        %v957 = vpack.c.bf16 %v952, %v952
        %v958 = vld [vmem:[%s6] sm:$0xf]
        %v959 = vld [vmem:[%s6 + $0x4] sm:$0xf]
        %s960 = scalar_lea.vmem %s3, 16
        %v961 = vld [vmem:[%s960] sm:$0xf]
        %v962 = vld [vmem:[%s960 + $0x4] sm:$0xf]
        %v963 = vld [vmem:[%s960 + $0x8] sm:$0xf]
        %v964 = vld [vmem:[%s960 + $0xc] sm:$0xf]
        %v969 = vunpack.c.l.b16 %v961
        %v970 = vunpack.c.l.b16 %v962
        %v971 = vunpack.c.l.b16 %v963
        %v972 = vunpack.c.l.b16 %v964
        %v973 = vpack.c.b16 %v970, %v969
        %v974 = vpack.c.b16 %v972, %v971
        %977 = vmatprep.subr.bf16.mxu0 0
        %978 = vmatpush1.bf16.msra.mxu0 %v973
        %979 = vmatprep.subr.bf16.mxu0 0
        %980 = vmatpush1.bf16.msra.mxu0 %v974
        %981 = vmatprep.subr.bf16.mxu0 0
        %982 = vmatpush1.bf16.msra.mxu0 0
        %983 = vmatprep.subr.bf16.mxu0 0
        %984 = vmatpush1.bf16.msra.mxu0 0
        %985 = vmatprep.subr.bf16.mxu0 0
        %986 = vmatpush1.bf16.msra.mxu0 0
        %987 = vmatprep.subr.bf16.mxu0 0
        %988 = vmatpush1.bf16.msra.mxu0 0
        %989 = vmatprep.subr.bf16.mxu0 0
        %990 = vmatpush1.bf16.msra.mxu0 0
        %991 = vmatprep.subr.bf16.mxu0 0
        %992 = vmatpush1.bf16.msra.mxu0 0
        %993 = vmatprep.subr.bf16.mxu0 0
        %994 = vmatpush1.bf16.msra.mxu0 0
        %995 = vmatprep.subr.bf16.mxu0 0
        %996 = vmatpush1.bf16.msra.mxu0 0
        %997 = vmatprep.subr.bf16.mxu0 0
        %998 = vmatpush1.bf16.msra.mxu0 0
        %999 = vmatprep.subr.bf16.mxu0 0
        %1000 = vmatpush1.bf16.msra.mxu0 0
        %1001 = vmatprep.subr.bf16.mxu0 0
        %1002 = vmatpush1.bf16.msra.mxu0 0
        %1003 = vmatprep.subr.bf16.mxu0 0
        %1004 = vmatpush1.bf16.msra.mxu0 0
        %1005 = vmatprep.subr.bf16.mxu0 0
        %1006 = vmatpush1.bf16.msra.mxu0 0
        %1007 = vmatprep.subr.bf16.mxu0 0
        %1008 = vmatpush1.bf16.msra.mxu0 0
        %1009 = vmatprep.mubr.bf16.mxu0 0
        %1010 = vmatmul.mubr.bf16.gmra.mrb[0].mxu0 %v805
        %v1011 = vpop.f32.mrb[0].mxu0
        %v1012 = vadd.f32 0.0, %v1011
        %v1013 = vpop.f32.mrb[0].mxu0
        %v1014 = vpop.f32.mrb[0].mxu0
        %v1015 = vpop.f32.mrb[0].mxu0
        %1016 = vdwg.mxu0
        %v1017 = vpack.c.bf16 %v1012, %v1012
        %s1018 = scalar_lea.vmem [#allocation2], 4
        %v1019 = vld [vmem:[%s1018] sm:$0xf]
        %v1021 = vsel %vm849, %v1017, 0
        %v1024 = vsel %vm849, %v1019, 0
        %1026 = vmatprep.subr.bf16.mxu0 0
        %1027 = vmatpush1.bf16.xpose.msra.mxu0 %v1024
        %1028 = vmatprep.subr.bf16.mxu0 0
        %1029 = vmatpush1.bf16.xpose.msra.mxu0 0
        %1030 = vmatprep.subr.bf16.mxu0 0
        %1031 = vmatpush1.bf16.xpose.msra.mxu0 0
        %1032 = vmatprep.subr.bf16.mxu0 0
        %1033 = vmatpush1.bf16.xpose.msra.mxu0 0
        %1034 = vmatprep.subr.bf16.mxu0 0
        %1035 = vmatpush1.bf16.xpose.msra.mxu0 0
        %1036 = vmatprep.subr.bf16.mxu0 0
        %1037 = vmatpush1.bf16.xpose.msra.mxu0 0
        %1038 = vmatprep.subr.bf16.mxu0 0
        %1039 = vmatpush1.bf16.xpose.msra.mxu0 0
        %1040 = vmatprep.subr.bf16.mxu0 0
        %1041 = vmatpush1.bf16.xpose.msra.mxu0 0
        %1042 = vmatprep.subr.bf16.mxu0 0
        %1043 = vmatpush1.bf16.xpose.msra.mxu0 0
        %1044 = vmatprep.subr.bf16.mxu0 0
        %1045 = vmatpush1.bf16.xpose.msra.mxu0 0
        %1046 = vmatprep.subr.bf16.mxu0 0
        %1047 = vmatpush1.bf16.xpose.msra.mxu0 0
        %1048 = vmatprep.subr.bf16.mxu0 0
        %1049 = vmatpush1.bf16.xpose.msra.mxu0 0
        %1050 = vmatprep.subr.bf16.mxu0 0
        %1051 = vmatpush1.bf16.xpose.msra.mxu0 0
        %1052 = vmatprep.subr.bf16.mxu0 0
        %1053 = vmatpush1.bf16.xpose.msra.mxu0 0
        %1054 = vmatprep.subr.bf16.mxu0 0
        %1055 = vmatpush1.bf16.xpose.msra.mxu0 0
        %1056 = vmatprep.subr.bf16.mxu0 0
        %1057 = vmatpush1.bf16.xpose.msra.mxu0 0
        %1058 = vmatprep.mubr.bf16.mxu0 0
        %1059 = vmatmul.mubr.bf16.gmra.mrb[0].mxu0 %v1021
        %v1060 = vpop.f32.mrb[0].mxu0
        %v1061 = vadd.f32 0.0, %v1060
        %v1062 = vpop.f32.mrb[0].mxu0
        %v1063 = vpop.f32.mrb[0].mxu0
        %v1064 = vpop.f32.mrb[0].mxu0
        %1065 = vdwg.mxu0
        %v1066 = vsel %vm896, %v1061, -inf
        %1067 = vmax.xlane.f32.xlu0 %v1066
        %v1068 = vpop.xlane.xlu0 %1067
        %v1069 = vsub.f32 %v1061, %v1068
        %v1070 = vmul.f32 %v1069, 1.442695
        %v1071 = vpow.pop %v1070
        %v1072 = vsel %vm896, %v1071, 0.0
        %1073 = vadd.xlane.f32.xlu0 %v1072
        %v1074 = vpop.xlane.xlu0 %1073
        %v1075 = vrcp.pop %v1074
        %v1076 = vmul.f32 %v1071, %v1075
        %v1077 = vpack.c.bf16 %v1076, %v1076
        %s1078 = scalar_lea.vmem [#allocation3], 4
        %v1079 = vld [vmem:[%s1078] sm:$0xf]
        %v1081 = vsel %vm896, %v1077, 0
        %v1084 = vsel %vm913, %v1079, 0
        %1086 = vmatprep.subr.bf16.mxu0 0
        %1087 = vmatpush1.bf16.msra.mxu0 %v1084
        %1088 = vmatprep.subr.bf16.mxu0 0
        %1089 = vmatpush1.bf16.msra.mxu0 0
        %1090 = vmatprep.subr.bf16.mxu0 0
        %1091 = vmatpush1.bf16.msra.mxu0 0
        %1092 = vmatprep.subr.bf16.mxu0 0
        %1093 = vmatpush1.bf16.msra.mxu0 0
        %1094 = vmatprep.subr.bf16.mxu0 0
        %1095 = vmatpush1.bf16.msra.mxu0 0
        %1096 = vmatprep.subr.bf16.mxu0 0
        %1097 = vmatpush1.bf16.msra.mxu0 0
        %1098 = vmatprep.subr.bf16.mxu0 0
        %1099 = vmatpush1.bf16.msra.mxu0 0
        %1100 = vmatprep.subr.bf16.mxu0 0
        %1101 = vmatpush1.bf16.msra.mxu0 0
        %1102 = vmatprep.subr.bf16.mxu0 0
        %1103 = vmatpush1.bf16.msra.mxu0 0
        %1104 = vmatprep.subr.bf16.mxu0 0
        %1105 = vmatpush1.bf16.msra.mxu0 0
        %1106 = vmatprep.subr.bf16.mxu0 0
        %1107 = vmatpush1.bf16.msra.mxu0 0
        %1108 = vmatprep.subr.bf16.mxu0 0
        %1109 = vmatpush1.bf16.msra.mxu0 0
        %1110 = vmatprep.subr.bf16.mxu0 0
        %1111 = vmatpush1.bf16.msra.mxu0 0
        %1112 = vmatprep.subr.bf16.mxu0 0
        %1113 = vmatpush1.bf16.msra.mxu0 0
        %1114 = vmatprep.subr.bf16.mxu0 0
        %1115 = vmatpush1.bf16.msra.mxu0 0
        %1116 = vmatprep.subr.bf16.mxu0 0
        %1117 = vmatpush1.bf16.msra.mxu0 0
        %1118 = vmatprep.mubr.bf16.mxu0 0
        %1119 = vmatmul.mubr.bf16.gmra.mrb[0].mxu0 %v1081
        %v1120 = vpop.f32.mrb[0].mxu0
        %v1121 = vadd.f32 0.0, %v1120
        %v1122 = vpop.f32.mrb[0].mxu0
        %v1123 = vpop.f32.mrb[0].mxu0
        %v1124 = vpop.f32.mrb[0].mxu0
        %1125 = vdwg.mxu0
        %v1126 = vpack.c.bf16 %v1121, %v1121
        %s1127 = scalar_lea.vmem %s6, 8
        %v1128 = vld [vmem:[%s1127] sm:$0xf]
        %v1129 = vld [vmem:[%s1127 + $0x4] sm:$0xf]
        %v1132 = vunpack.c.l.b16 %v1128
        %v1133 = vunpack.c.l.b16 %v1129
        %v1134 = vpack.c.b16 %v1133, %v1132
        %v1137 = vsel %vm849, %v1126, 0
        %1139 = vmatprep.subr.bf16.mxu0 0
        %1140 = vmatpush1.bf16.msra.mxu0 %v1134
        %1141 = vmatprep.subr.bf16.mxu0 0
        %1142 = vmatpush1.bf16.msra.mxu0 0
        %1143 = vmatprep.subr.bf16.mxu0 0
        %1144 = vmatpush1.bf16.msra.mxu0 0
        %1145 = vmatprep.subr.bf16.mxu0 0
        %1146 = vmatpush1.bf16.msra.mxu0 0
        %1147 = vmatprep.subr.bf16.mxu0 0
        %1148 = vmatpush1.bf16.msra.mxu0 0
        %1149 = vmatprep.subr.bf16.mxu0 0
        %1150 = vmatpush1.bf16.msra.mxu0 0
        %1151 = vmatprep.subr.bf16.mxu0 0
        %1152 = vmatpush1.bf16.msra.mxu0 0
        %1153 = vmatprep.subr.bf16.mxu0 0
        %1154 = vmatpush1.bf16.msra.mxu0 0
        %1155 = vmatprep.subr.bf16.mxu0 0
        %1156 = vmatpush1.bf16.msra.mxu0 0
        %1157 = vmatprep.subr.bf16.mxu0 0
        %1158 = vmatpush1.bf16.msra.mxu0 0
        %1159 = vmatprep.subr.bf16.mxu0 0
        %1160 = vmatpush1.bf16.msra.mxu0 0
        %1161 = vmatprep.subr.bf16.mxu0 0
        %1162 = vmatpush1.bf16.msra.mxu0 0
        %1163 = vmatprep.subr.bf16.mxu0 0
        %1164 = vmatpush1.bf16.msra.mxu0 0
        %1165 = vmatprep.subr.bf16.mxu0 0
        %1166 = vmatpush1.bf16.msra.mxu0 0
        %1167 = vmatprep.subr.bf16.mxu0 0
        %1168 = vmatpush1.bf16.msra.mxu0 0
        %1169 = vmatprep.subr.bf16.mxu0 0
        %1170 = vmatpush1.bf16.msra.mxu0 0
        %1171 = vmatprep.mubr.bf16.mxu0 0
        %1172 = vmatmul.mubr.bf16.gmra.mrb[0].mxu0 %v1137
        %v1173 = vpop.f32.mrb[0].mxu0
        %v1174 = vadd.f32 0.0, %v1173
        %v1175 = vpop.f32.mrb[0].mxu0
        %v1176 = vpop.f32.mrb[0].mxu0
        %v1177 = vpop.f32.mrb[0].mxu0
        %1178 = vdwg.mxu0
        %v1181 = vunpack.c.l.b16 %v958
        %v1182 = vunpack.c.l.b16 %v959
        %v1183 = vpack.c.b16 %v1182, %v1181
        %v1186 = vsel %vm849, %v957, 0
        %1188 = vmatprep.subr.bf16.mxu0 0
        %1189 = vmatpush1.bf16.msra.mxu0 %v1183
        %1190 = vmatprep.subr.bf16.mxu0 0
        %1191 = vmatpush1.bf16.msra.mxu0 0
        %1192 = vmatprep.subr.bf16.mxu0 0
        %1193 = vmatpush1.bf16.msra.mxu0 0
        %1194 = vmatprep.subr.bf16.mxu0 0
        %1195 = vmatpush1.bf16.msra.mxu0 0
        %1196 = vmatprep.subr.bf16.mxu0 0
        %1197 = vmatpush1.bf16.msra.mxu0 0
        %1198 = vmatprep.subr.bf16.mxu0 0
        %1199 = vmatpush1.bf16.msra.mxu0 0
        %1200 = vmatprep.subr.bf16.mxu0 0
        %1201 = vmatpush1.bf16.msra.mxu0 0
        %1202 = vmatprep.subr.bf16.mxu0 0
        %1203 = vmatpush1.bf16.msra.mxu0 0
        %1204 = vmatprep.subr.bf16.mxu0 0
        %1205 = vmatpush1.bf16.msra.mxu0 0
        %1206 = vmatprep.subr.bf16.mxu0 0
        %1207 = vmatpush1.bf16.msra.mxu0 0
        %1208 = vmatprep.subr.bf16.mxu0 0
        %1209 = vmatpush1.bf16.msra.mxu0 0
        %1210 = vmatprep.subr.bf16.mxu0 0
        %1211 = vmatpush1.bf16.msra.mxu0 0
        %1212 = vmatprep.subr.bf16.mxu0 0
        %1213 = vmatpush1.bf16.msra.mxu0 0
        %1214 = vmatprep.subr.bf16.mxu0 0
        %1215 = vmatpush1.bf16.msra.mxu0 0
        %1216 = vmatprep.subr.bf16.mxu0 0
        %1217 = vmatpush1.bf16.msra.mxu0 0
        %1218 = vmatprep.subr.bf16.mxu0 0
        %1219 = vmatpush1.bf16.msra.mxu0 0
        %1220 = vmatprep.mubr.bf16.mxu0 0
        %1221 = vmatmul.mubr.bf16.gmra.mrb[0].mxu0 %v1186
        %v1222 = vpop.f32.mrb[0].mxu0
        %v1223 = vadd.f32 %v1174, %v1222
        %v1224 = vpop.f32.mrb[0].mxu0
        %v1225 = vpop.f32.mrb[0].mxu0
        %v1226 = vpop.f32.mrb[0].mxu0
        %1227 = vdwg.mxu0
        %v1228 = vadd.f32 %v755, %v1223
        %v1229 = vld [vmem:[%s7] sm:$0x1]
        %v1231 = vlaneseq
        %v1232 = vshrl.u32 %v1231, 7
        %v1233 = vsub.s32 0, %v1232
        %v1234 = vrot.slane %v1229, %v1233
        %v1236 = vadd.f32 %v1228, %v1234
        %v1237 = vld [vmem:[%s8] sm:$0x1]
        %v1238 = vld [vmem:[%s9] sm:$0x1]
        %v1239 = vsel %vm758, %v1236, 0.0
        %1240 = vadd.xlane.f32.xlu0 %v1239
        %v1241 = vpop.xlane.xlu0 %1240
        %v1242 = vmul.f32 %v1241, %v762
        %v1243 = vsub.f32 %v1236, %v1242
        %v1244 = vmul.f32 %v1243, %v1243
        %v1245 = vsel %vm758, %v1244, 0.0
        %1246 = vadd.xlane.f32.xlu0 %v1245
        %v1247 = vpop.xlane.xlu0 %1246
        %v1248 = vmul.f32 %v1247, %v762
        %v1249 = vadd.f32 %v1248, 1e-05
        %v1250 = vrsqrt.pop %v1249
        %v1251 = vmul.f32 %v1243, %v1250
        %v1253 = vlaneseq
        %v1254 = vshrl.u32 %v1253, 7
        %v1255 = vsub.s32 0, %v1254
        %v1256 = vrot.slane %v1237, %v1255
        %v1258 = vmul.f32 %v1251, %v1256
        %v1260 = vlaneseq
        %v1261 = vshrl.u32 %v1260, 7
        %v1262 = vsub.s32 0, %v1261
        %v1263 = vrot.slane %v1238, %v1262
        %v1265 = vadd.f32 %v1258, %v1263
        %v1266 = vpack.c.bf16 %v1265, %v1265
        %v1267 = vld [vmem:[%s10] sm:$0xf]
        %v1268 = vld [vmem:[%s10 + $0x4] sm:$0xf]
        %v1269 = vld [vmem:[%s10 + $0x8] sm:$0xf]
        %v1270 = vld [vmem:[%s10 + $0xc] sm:$0xf]
        %v1271 = vld [vmem:[%s11] sm:$0x1]
        %v1273 = vlaneseq
        %v1274 = vshrl.u32 %v1273, 7
        %v1275 = vsub.s32 0, %v1274
        %v1276 = vrot.slane %v1271, %v1275
        %v1282 = vunpack.c.l.b16 %v1267
        %v1283 = vunpack.c.l.b16 %v1268
        %v1284 = vunpack.c.l.b16 %v1269
        %v1285 = vunpack.c.l.b16 %v1270
        %v1286 = vpack.c.b16 %v1283, %v1282
        %v1287 = vpack.c.b16 %v1285, %v1284
        %v1291 = vsel %vm758, %v1266, 0
        %1293 = vmatprep.subr.bf16.mxu0 0
        %1294 = vmatpush1.bf16.msra.mxu0 %v1286
        %1295 = vmatprep.subr.bf16.mxu0 0
        %1296 = vmatpush1.bf16.msra.mxu0 %v1287
        %1297 = vmatprep.subr.bf16.mxu0 0
        %1298 = vmatpush1.bf16.msra.mxu0 0
        %1299 = vmatprep.subr.bf16.mxu0 0
        %1300 = vmatpush1.bf16.msra.mxu0 0
        %1301 = vmatprep.subr.bf16.mxu0 0
        %1302 = vmatpush1.bf16.msra.mxu0 0
        %1303 = vmatprep.subr.bf16.mxu0 0
        %1304 = vmatpush1.bf16.msra.mxu0 0
        %1305 = vmatprep.subr.bf16.mxu0 0
        %1306 = vmatpush1.bf16.msra.mxu0 0
        %1307 = vmatprep.subr.bf16.mxu0 0
        %1308 = vmatpush1.bf16.msra.mxu0 0
        %1309 = vmatprep.subr.bf16.mxu0 0
        %1310 = vmatpush1.bf16.msra.mxu0 0
        %1311 = vmatprep.subr.bf16.mxu0 0
        %1312 = vmatpush1.bf16.msra.mxu0 0
        %1313 = vmatprep.subr.bf16.mxu0 0
        %1314 = vmatpush1.bf16.msra.mxu0 0
        %1315 = vmatprep.subr.bf16.mxu0 0
        %1316 = vmatpush1.bf16.msra.mxu0 0
        %1317 = vmatprep.subr.bf16.mxu0 0
        %1318 = vmatpush1.bf16.msra.mxu0 0
        %1319 = vmatprep.subr.bf16.mxu0 0
        %1320 = vmatpush1.bf16.msra.mxu0 0
        %1321 = vmatprep.subr.bf16.mxu0 0
        %1322 = vmatpush1.bf16.msra.mxu0 0
        %1323 = vmatprep.subr.bf16.mxu0 0
        %1324 = vmatpush1.bf16.msra.mxu0 0
        %1325 = vmatprep.mubr.bf16.mxu0 0
        %1326 = vmatmul.mubr.bf16.gmra.mrb[0].mxu0 %v1291
        %v1327 = vpop.f32.mrb[0].mxu0
        %v1328 = vadd.f32 %v1276, %v1327
        %v1329 = vpop.f32.mrb[0].mxu0
        %v1330 = vpop.f32.mrb[0].mxu0
        %v1331 = vpop.f32.mrb[0].mxu0
        %1332 = vdwg.mxu0
        %v1333 = vmax.f32 %v1328, 0.0
        %v1334 = vpack.c.bf16 %v1333, %v1333
        %v1335 = vld [vmem:[%s12] sm:$0xf]
        %v1336 = vld [vmem:[%s12 + $0x4] sm:$0xf]
        %v1337 = vld [vmem:[%s12 + $0x8] sm:$0xf]
        %v1338 = vld [vmem:[%s12 + $0xc] sm:$0xf]
        %v1339 = vld [vmem:[%s12 + $0x10] sm:$0xf]
        %v1340 = vld [vmem:[%s12 + $0x14] sm:$0xf]
        %v1341 = vld [vmem:[%s12 + $0x18] sm:$0xf]
        %v1342 = vld [vmem:[%s12 + $0x1c] sm:$0xf]
        %v1343 = vld [vmem:[%s13] sm:$0x1]
        %v1345 = vlaneseq
        %v1346 = vshrl.u32 %v1345, 7
        %v1347 = vsub.s32 0, %v1346
        %v1348 = vrot.slane %v1343, %v1347
        %v1358 = vunpack.c.l.b16 %v1335
        %v1359 = vunpack.c.l.b16 %v1336
        %v1360 = vunpack.c.l.b16 %v1337
        %v1361 = vunpack.c.l.b16 %v1338
        %v1362 = vunpack.c.l.b16 %v1339
        %v1363 = vunpack.c.l.b16 %v1340
        %v1364 = vunpack.c.l.b16 %v1341
        %v1365 = vunpack.c.l.b16 %v1342
        %v1366 = vpack.c.b16 %v1359, %v1358
        %v1367 = vpack.c.b16 %v1361, %v1360
        %v1368 = vpack.c.b16 %v1363, %v1362
        %v1369 = vpack.c.b16 %v1365, %v1364
        %vm1374 = vcmask 523264
        %v1376 = vsel %vm1374, %v1334, 0
        %1378 = vmatprep.subr.bf16.mxu0 0
        %1379 = vmatpush1.bf16.msra.mxu0 %v1366
        %1380 = vmatprep.subr.bf16.mxu0 0
        %1381 = vmatpush1.bf16.msra.mxu0 %v1367
        %1382 = vmatprep.subr.bf16.mxu0 0
        %1383 = vmatpush1.bf16.msra.mxu0 %v1368
        %1384 = vmatprep.subr.bf16.mxu0 0
        %1385 = vmatpush1.bf16.msra.mxu0 %v1369
        %1386 = vmatprep.subr.bf16.mxu0 0
        %1387 = vmatpush1.bf16.msra.mxu0 0
        %1388 = vmatprep.subr.bf16.mxu0 0
        %1389 = vmatpush1.bf16.msra.mxu0 0
        %1390 = vmatprep.subr.bf16.mxu0 0
        %1391 = vmatpush1.bf16.msra.mxu0 0
        %1392 = vmatprep.subr.bf16.mxu0 0
        %1393 = vmatpush1.bf16.msra.mxu0 0
        %1394 = vmatprep.subr.bf16.mxu0 0
        %1395 = vmatpush1.bf16.msra.mxu0 0
        %1396 = vmatprep.subr.bf16.mxu0 0
        %1397 = vmatpush1.bf16.msra.mxu0 0
        %1398 = vmatprep.subr.bf16.mxu0 0
        %1399 = vmatpush1.bf16.msra.mxu0 0
        %1400 = vmatprep.subr.bf16.mxu0 0
        %1401 = vmatpush1.bf16.msra.mxu0 0
        %1402 = vmatprep.subr.bf16.mxu0 0
        %1403 = vmatpush1.bf16.msra.mxu0 0
        %1404 = vmatprep.subr.bf16.mxu0 0
        %1405 = vmatpush1.bf16.msra.mxu0 0
        %1406 = vmatprep.subr.bf16.mxu0 0
        %1407 = vmatpush1.bf16.msra.mxu0 0
        %1408 = vmatprep.subr.bf16.mxu0 0
        %1409 = vmatpush1.bf16.msra.mxu0 0
        %1410 = vmatprep.mubr.bf16.mxu0 0
        %1411 = vmatmul.mubr.bf16.gmra.mrb[0].mxu0 %v1376
        %v1412 = vpop.f32.mrb[0].mxu0
        %v1413 = vadd.f32 %v1348, %v1412
        %v1414 = vpop.f32.mrb[0].mxu0
        %v1415 = vpop.f32.mrb[0].mxu0
        %v1416 = vpop.f32.mrb[0].mxu0
        %1417 = vdwg.mxu0
        %v1418 = vadd.f32 %v1236, %v1413
        %1419 = vst.msk [vmem:[%s472] sm:$0xff] %vm758, %v1418
        %s1420 = sand.u32 %s349, 1
        %s1421 = scalar_lea.sflag [#allocation5], %s1420
        %s1422 = sand.u32 %s349, 1
        %s1423 = smul.addr %s1422, 8
        %s1424 = scalar_lea.vmem [#allocation4], %s1423
        // Predicated region
        $region81: #{tpu_custom_call.1} parent=75 // pred_check
          %p1425 = pneg %p359
        $region82: #{tpu_custom_call.1} parent=75 // pred_check_branch
          %1427 = sbr.rel (%p1425) target = $region84
        $region83: #{tpu_custom_call.1} parent=75 // pred_region
          %s1429 = ssub.s32 128, 128
          %1430 = vsyncadd %s1421, %s1429
          %s1431 = sadd.s32 %s33, %s32
          %s1432 = smul.addr %s1431, 128
          %s1433 = scalar_lea.hbm %s14, %s1432
          %s1435 = sshll.u32 %s1424, 4
          %s1436 = int_to_ptr.vmem [resolvable:$true] %s1435
          %1438 = dma.vmem_to_hbm [thread:$0]  %s1436, 128, %s1433, %s1421
        $region84: #{tpu_custom_call.1} parent=75 // pred_fallthru
          _
      $region76: #{tpu_custom_call.1} parent=5 // pred_fallthru
        _
      %p1439 = scmp.le.s32.totalorder 2, %s23
      // Predicated region
      $region85: #{tpu_custom_call.1} parent=5 // pred_check
        %p1440 = pneg %p1439
      $region86: #{tpu_custom_call.1} parent=5 // pred_check_branch
        %1442 = sbr.rel (%p1440) target = $region88
      $region87: #{tpu_custom_call.1} parent=5 // pred_region
        %s1443 = ssub.s32 %s23, 2
        // Predicated region
        $region89: #{tpu_custom_call.1} parent=87 // pred_check
          %p1444 = pneg %p365
        $region90: #{tpu_custom_call.1} parent=87 // pred_check_branch
          %1446 = sbr.rel (%p1444) target = $region92
        $region91: #{tpu_custom_call.1} parent=87 // pred_region
          %s1447 = sand.u32 %s350, 1
          %s1448 = scalar_lea.sflag [#allocation5], %s1447
          %s1449 = sand.u32 %s350, 1
          %s1450 = smul.addr %s1449, 8
          %s1451 = scalar_lea.vmem [#allocation4], %s1450
          %1452 = dma.done %s1448, 128
        $region92: #{tpu_custom_call.1} parent=87 // pred_fallthru
          _
      $region88: #{tpu_custom_call.1} parent=5 // pred_fallthru
        _
    $region6: #{tpu_custom_call.1} parent=1 // loop_footer
      %s27 = sadd.s32 1, %s23
    $region7: #{tpu_custom_call.1} parent=1 // loop_footer_branch
      %22 = sbr.rel target = $region3
    $region8: #{tpu_custom_call.1} parent=1 // loop_exit
      _
    %1453 = vsyncpa [#allocation5], 1
    %s1454 = scalar_lea.sflag [#allocation5], 1
    %1455 = vsyncpa %s1454, 1

</llo_original>
